<compile_context>
chip_gen: v6e
topology: v6e:2x2x1
jax: 0.10.0
libtpu: 0.0.40
codegen_flags: <defaults>
</compile_context>

<pallas_src>
import jax
import jax.numpy as jnp
from jax.experimental import pallas as pl
from jax.experimental.pallas import tpu as pltpu

# ---------------------------------------------------------------------------
# hyper-parameters (small, deterministic)
# ---------------------------------------------------------------------------
B = 2                       # batch
NUM_CLASSES = 8             # number_of_classes
TCN_IN_CH = 4               # tcn_inputs_channal
T_TCN = 16                  # temporal length of the TCN/LSTM input
CONV_CH = 32                # Conv1d output channels inside CNN_LSTM
CONV_K = 3                  # Conv1d kernel size (padding=1)
LSTM_OUT = 52               # self.lstm_out_dim
LSTM_PAD = 64               # 52 padded to 64 for clean tiles (pad cols stay 0)
NUM_SEGMENTS = 12           # TRN num_segments
SEG_FEAT = 32               # per-segment input feature dim for TRN
FEATURE_BOTTLENECK = 64     # feature_bottleneck (TRN output dim)
FUSHION_DIM = 32            # fushion_dim
RANK = 4                    # rank
HIDDEN_DIM = 32             # hidden_dim (LMF per-modality hidden)

HP = LSTM_PAD               # 64
GATES = 4 * HP              # 256
RF = RANK * FUSHION_DIM     # 128

VMEM = pltpu.MemorySpace.VMEM


def _v():
    return pl.BlockSpec(memory_space=VMEM)


# ---------------------------------------------------------------------------
# the single fused kernel
# ---------------------------------------------------------------------------
def fused_net_kernel(trn_x_ref, taps_ref, pA_ref, pB_ref, pC_ref, bias_ref,
                     out_ref, xproj_ref):
    """One fused forward pass; everything resident in VMEM.

    Weight packs (bf16), sliced with 8/16-row-aligned static views:
      pA (160,256): wx_cat[0:32], wh_cat[32:96], factor_blockdiag[96:160]
      pB (160, 64): trn_w[0:32],  [wa|0][32:96],  [0|wv_pad][96:160]
      pC (144, 32): conv_w_im2col[0:12] (rows 12:16 zero), wc_tiled_pad[16:144]
    Bias pack (f32, 8x256), one bias per row, left-aligned lanes:
      row0 bg, row1 factor_b, row2 trn_b, row3 [ba|bv], row4 conv_b,
      row5 bc_eff, rows6:8 seg_mean (2,24).
    """
    f32 = jnp.float32
    bf16 = jnp.bfloat16
    nb = out_ref.shape[0]               # batch (2)
    tb = taps_ref.shape[0]              # T*B (32)
    t_len = tb // nb                    # timesteps (16)
    hp = HP                             # padded LSTM hidden (64)

    # ---- biases / constants carved from the f32 bias pack -------------------
    bg = bias_ref[0:1, :]                                   # (1, 256)
    factor_b = bias_ref[1:2, :]                             # (1, 256)
    trn_b = bias_ref[2:3, 0:FEATURE_BOTTLENECK]             # (1, 64)
    av_b = bias_ref[3:4, 0:2 * HIDDEN_DIM]                  # (1, 64)
    conv_b = bias_ref[4:5, 0:CONV_CH]                       # (1, 32)
    bc_eff = bias_ref[5:6, 0:NUM_CLASSES]                   # (1, 8)
    seg_mean = bias_ref[6:8, 0:nb * NUM_SEGMENTS].astype(bf16)  # (2, 24)

    # ---- TRN branch: (B*S, F) -> (B, feature_bottleneck) --------------------
    h_seg = jnp.maximum(
        jnp.dot(trn_x_ref[...].astype(bf16), pB_ref[0:SEG_FEAT, :],
                preferred_element_type=f32) + trn_b, 0.0)            # (24, 64)
    trn_feat = jnp.dot(seg_mean, h_seg.astype(bf16),
                       preferred_element_type=f32)                    # (2, 64)

    # ---- Conv1d(k=3, pad=1) + ReLU via im2col --------------------------------
    conv = jnp.maximum(
        jnp.dot(taps_ref[...].astype(bf16), pC_ref[0:CONV_K * TCN_IN_CH, :],
                preferred_element_type=f32) + conv_b, 0.0)            # (32, 32)

    # ---- LSTM input projection (hoisted), spilled to VMEM scratch ------------
    xproj_ref[...] = jnp.dot(conv.astype(bf16), pA_ref[0:CONV_CH, :],
                             preferred_element_type=f32) + bg         # (32, 256)

    # ---- LSTM recurrence, T=16 unrolled, gate order [i, f, o, g] -------------
    # wh is read from the ref inside the loop (not hoisted) and xproj is
    # re-read per step from scratch -> minimal live vregs across the unroll.
    h = jnp.zeros((nb, hp), f32)
    c = jnp.zeros((nb, hp), f32)
    for t in range(t_len):
        g = (xproj_ref[t * nb:(t + 1) * nb, :] +
             jnp.dot(h.astype(bf16), pA_ref[CONV_CH:CONV_CH + hp, :],
                     preferred_element_type=f32))                     # (2, 256)
        ifo = jax.nn.sigmoid(g[:, 0:3 * hp])                          # (2, 192)
        gg = jnp.tanh(g[:, 3 * hp:4 * hp])                            # (2, 64)
        c = ifo[:, hp:2 * hp] * c + ifo[:, 0:hp] * gg
        h = ifo[:, 2 * hp:3 * hp] * jnp.tanh(c)
    # padded hidden lanes 52..63 stay exactly 0: zero weights/bias -> gate
    # pre-act 0 -> c_pad stays 0 and h_pad = sigmoid(0)*tanh(0) = 0.

    # ---- LMF fusion tail ------------------------------------------------------
    # block-diagonal first stage realised as two lane-padded halves + add
    # (avoids an in-kernel lane concat); result is [a_h | v_h] in one value.
    ah_vh = jnp.maximum(
        jnp.dot(trn_feat.astype(bf16), pB_ref[32:96, :],
                preferred_element_type=f32)
        + jnp.dot(h.astype(bf16), pB_ref[96:160, :],
                  preferred_element_type=f32)
        + av_b, 0.0)                                                  # (2, 64)
    favv = jnp.dot(ah_vh.astype(bf16), pA_ref[96:160, :],
                   preferred_element_type=f32) + factor_b             # (2, 256)
    prod = favv[:, 0:RF] * favv[:, RF:2 * RF]                         # (2, 128)
    logits = jnp.dot(prod.astype(bf16), pC_ref[16:144, :],
                     preferred_element_type=f32)                      # (2, 32)
    out_ref[...] = logits[:, 0:NUM_CLASSES] + bc_eff                  # (2, 8)


# ---------------------------------------------------------------------------
# parameters: natural forms -> 3 bf16 weight packs + 1 f32 bias pack
# ---------------------------------------------------------------------------
def init_params(key):
    ks = jax.random.split(key, 12)
    s = 0.1
    f32 = jnp.float32
    bf16 = jnp.bfloat16
    H = LSTM_OUT

    # ---- natural-shape weights (random reconstruction) ----
    trn_w = jax.random.normal(ks[0], (SEG_FEAT, FEATURE_BOTTLENECK), f32) * s
    trn_b = jnp.zeros((FEATURE_BOTTLENECK,), f32)

    conv_w = jax.random.normal(ks[1], (CONV_K, TCN_IN_CH, CONV_CH), f32) * s
    conv_b = jnp.zeros((CONV_CH,), f32)

    lstm_wx = jax.random.normal(ks[2], (4, CONV_CH, H), f32) * s    # [i, f, g, o]
    lstm_wh = jax.random.normal(ks[3], (4, H, H), f32) * s
    lstm_b = jnp.zeros((4, H), f32)

    lmf_wa = jax.random.normal(ks[4], (FEATURE_BOTTLENECK, HIDDEN_DIM), f32) * s
    lmf_ba = jnp.zeros((HIDDEN_DIM,), f32)
    lmf_wv = jax.random.normal(ks[5], (H, HIDDEN_DIM), f32) * s
    lmf_bv = jnp.zeros((HIDDEN_DIM,), f32)
    af = jax.random.normal(ks[6], (RANK, HIDDEN_DIM + 1, FUSHION_DIM), f32) * s
    vf = jax.random.normal(ks[7], (RANK, HIDDEN_DIM + 1, FUSHION_DIM), f32) * s
    fw = jax.random.normal(ks[8], (1, RANK), f32) * s
    fb = jnp.zeros((1, FUSHION_DIM), f32)
    wc = jax.random.normal(ks[9], (FUSHION_DIM, NUM_CLASSES), f32) * s
    bc = jnp.zeros((1, NUM_CLASSES), f32)

    # ---- Conv1d weight for im2col: (K*Cin, Cout) ----
    conv_w_flat = conv_w.reshape(CONV_K * TCN_IN_CH, CONV_CH)         # (12, 32)

    # ---- LSTM: pad hidden 52->64, reorder gates [i,f,g,o] -> [i,f,o,g] ----
    # (keep this order in sync with the kernel's gate slices)
    order = (0, 1, 3, 2)
    wx_p = jnp.pad(lstm_wx, ((0, 0), (0, 0), (0, HP - H)))            # (4, 32, 64)
    wh_p = jnp.pad(lstm_wh, ((0, 0), (0, HP - H), (0, HP - H)))       # (4, 64, 64)
    bg_p = jnp.pad(lstm_b, ((0, 0), (0, HP - H)))                     # (4, 64)
    wx_cat = jnp.concatenate([wx_p[g] for g in order], axis=1)        # (32, 256)
    wh_cat = jnp.concatenate([wh_p[g] for g in order], axis=1)        # (64, 256)
    bg_cat = jnp.concatenate([bg_p[g] for g in order], axis=0).reshape(1, GATES)

    # ---- LMF first stage: lane-padded halves of blockdiag(wa, wv_pad) ----
    wa_half = jnp.concatenate(
        [lmf_wa, jnp.zeros((FEATURE_BOTTLENECK, HIDDEN_DIM), f32)], axis=1)  # (64, 64)
    wv_pad = jnp.pad(lmf_wv, ((0, HP - H), (0, 0)))                   # (64, 32)
    wv_half = jnp.concatenate(
        [jnp.zeros((HP, HIDDEN_DIM), f32), wv_pad], axis=1)           # (64, 64)
    av_b = jnp.concatenate([lmf_ba, lmf_bv]).reshape(1, 2 * HIDDEN_DIM)

    # ---- LMF low-rank factors: fold fusion weights fw into the a-factors;
    # standard LMF appends the 1 at the END (z = [h, 1]) -> bias row = index -1.
    af_s = af * fw.reshape(RANK, 1, 1)
    af_bias = af_s[:, HIDDEN_DIM, :].reshape(1, RF)                   # (1, 128)
    af_rest = jnp.transpose(af_s[:, 0:HIDDEN_DIM, :], (1, 0, 2)).reshape(
        HIDDEN_DIM, RF)                                               # (32, 128)
    vf_bias = vf[:, HIDDEN_DIM, :].reshape(1, RF)                     # (1, 128)
    vf_rest = jnp.transpose(vf[:, 0:HIDDEN_DIM, :], (1, 0, 2)).reshape(
        HIDDEN_DIM, RF)                                               # (32, 128)
    factor_bd = jnp.concatenate([
        jnp.concatenate([af_rest, jnp.zeros((HIDDEN_DIM, RF), f32)], axis=1),
        jnp.concatenate([jnp.zeros((HIDDEN_DIM, RF), f32), vf_rest], axis=1)],
        axis=0)                                                       # (64, 256)
    factor_b = jnp.concatenate([af_bias, vf_bias], axis=1)            # (1, 256)

    # ---- classifier folded over the rank-sum, lanes padded 8 -> 32 ----
    wc_tiled = jnp.tile(wc, (RANK, 1))                                # (128, 8)
    wc_pad = jnp.pad(wc_tiled, ((0, 0), (0, CONV_CH - NUM_CLASSES)))  # (128, 32)
    bc_eff = (jnp.dot(fb, wc) + bc).reshape(NUM_CLASSES)              # (8,)

    # ---- constant segment-mean matrix: (B, B*S), rows sum to 1 ----
    seg_mean = jnp.repeat(jnp.eye(B, dtype=f32), NUM_SEGMENTS, axis=1) / NUM_SEGMENTS

    # ---- packs ----
    packA = jnp.concatenate([wx_cat, wh_cat, factor_bd], axis=0).astype(bf16)   # (160,256)
    packB = jnp.concatenate([trn_w, wa_half, wv_half], axis=0).astype(bf16)     # (160, 64)
    packC = jnp.concatenate(
        [jnp.pad(conv_w_flat, ((0, 4), (0, 0))), wc_pad], axis=0).astype(bf16)  # (144, 32)

    bias = jnp.zeros((8, GATES), f32)
    bias = bias.at[0, :].set(bg_cat[0])
    bias = bias.at[1, :].set(factor_b[0])
    bias = bias.at[2, 0:FEATURE_BOTTLENECK].set(trn_b)
    bias = bias.at[3, 0:2 * HIDDEN_DIM].set(av_b[0])
    bias = bias.at[4, 0:CONV_CH].set(conv_b)
    bias = bias.at[5, 0:NUM_CLASSES].set(bc_eff)
    bias = bias.at[6:8, 0:B * NUM_SEGMENTS].set(seg_mean)

    return {"packA": packA, "packB": packB, "packC": packC, "bias": bias}


# ---------------------------------------------------------------------------
# forward: one tiny host layout op + ONE fused pallas_call
# ---------------------------------------------------------------------------
@jax.jit
def net_forward(params, input_trn, input_tcn):
    nb, ns, nf = input_trn.shape
    _, cin, t_len = input_tcn.shape

    # TRN input flattened to (B*S, F) -- free, row-major bitcast.
    trn_x2d = input_trn.reshape(nb * ns, nf)

    # im2col for Conv1d(k=3, pad=1), time-major rows (row = t*B + b).
    # One tiny fused host op (< 1.5 KB); see TODO(synk) at top of file.
    xt = jnp.transpose(input_tcn, (2, 0, 1))                    # (T, B, Cin)
    xp = jnp.pad(xt, ((1, 1), (0, 0), (0, 0)))                  # (T+2, B, Cin)
    taps = jnp.concatenate(
        [xp[0:t_len], xp[1:t_len + 1], xp[2:t_len + 2]], axis=-1)   # (T, B, K*Cin)
    taps = taps.reshape(t_len * nb, CONV_K * cin)                # (T*B, K*Cin)

    logits = pl.pallas_call(
        fused_net_kernel,
        out_shape=jax.ShapeDtypeStruct((nb, NUM_CLASSES), jnp.float32),
        in_specs=[_v()] * 6,
        out_specs=_v(),
        scratch_shapes=[pltpu.VMEM((t_len * nb, GATES), jnp.float32)],
    )(trn_x2d, taps,
      params["packA"], params["packB"], params["packC"], params["bias"])
    return logits                                                # (B, num_classes)


# ---------------------------------------------------------------------------
if __name__ == "__main__":
    key = jax.random.PRNGKey(0)
    k_par, k_trn, k_tcn = jax.random.split(key, 3)

    params = init_params(k_par)
    input_trn = jax.random.normal(k_trn, (B, NUM_SEGMENTS, SEG_FEAT), jnp.float32)
    input_tcn = jax.random.normal(k_tcn, (B, TCN_IN_CH, T_TCN), jnp.float32)

    out = net_forward(params, input_trn, input_tcn)
    out = jax.block_until_ready(out)
    assert out.shape == (B, NUM_CLASSES), out.shape
    assert bool(jnp.all(jnp.isfinite(out)))
    print("KERNEL_OK")
</pallas_src>

<mosaic_0001>
module attributes {stable_mosaic.version = 11 : i64} {
  func.func @fused_net_kernel(%arg0: memref<24x32xf32, #tpu.memory_space<vmem>>, %arg1: memref<32x12xf32, #tpu.memory_space<vmem>>, %arg2: memref<160x256xbf16, #tpu.memory_space<vmem>>, %arg3: memref<160x64xbf16, #tpu.memory_space<vmem>>, %arg4: memref<144x32xbf16, #tpu.memory_space<vmem>>, %arg5: memref<8x256xf32, #tpu.memory_space<vmem>>, %arg6: memref<2x8xf32, #tpu.memory_space<vmem>>, %arg7: memref<32x256xf32, #tpu.memory_space<vmem>>) attributes {dimension_semantics = [], scalar_prefetch = 0 : i64, scratch_operands = 1 : i64, tpu.core_type = #tpu.core_type<tc>} {
    %c0 = arith.constant 0 : index
    %c0_0 = arith.constant 0 : index
    %0 = vector.load %arg5[%c0, %c0_0] : memref<8x256xf32, #tpu.memory_space<vmem>>, vector<1x256xf32>
    %c1 = arith.constant 1 : index
    %c0_1 = arith.constant 0 : index
    %1 = vector.load %arg5[%c1, %c0_1] : memref<8x256xf32, #tpu.memory_space<vmem>>, vector<1x256xf32>
    %c2 = arith.constant 2 : index
    %c0_2 = arith.constant 0 : index
    %2 = vector.load %arg5[%c2, %c0_2] : memref<8x256xf32, #tpu.memory_space<vmem>>, vector<1x64xf32>
    %c3 = arith.constant 3 : index
    %c0_3 = arith.constant 0 : index
    %3 = vector.load %arg5[%c3, %c0_3] : memref<8x256xf32, #tpu.memory_space<vmem>>, vector<1x64xf32>
    %c4 = arith.constant 4 : index
    %c0_4 = arith.constant 0 : index
    %4 = vector.load %arg5[%c4, %c0_4] : memref<8x256xf32, #tpu.memory_space<vmem>>, vector<1x32xf32>
    %c5 = arith.constant 5 : index
    %c0_5 = arith.constant 0 : index
    %5 = vector.load %arg5[%c5, %c0_5] : memref<8x256xf32, #tpu.memory_space<vmem>>, vector<1x8xf32>
    %c6 = arith.constant 6 : index
    %c0_6 = arith.constant 0 : index
    %6 = vector.load %arg5[%c6, %c0_6] : memref<8x256xf32, #tpu.memory_space<vmem>>, vector<2x24xf32>
    %7 = arith.truncf %6 : vector<2x24xf32> to vector<2x24xbf16>
    %c0_7 = arith.constant 0 : index
    %c0_8 = arith.constant 0 : index
    %8 = vector.load %arg0[%c0_7, %c0_8] : memref<24x32xf32, #tpu.memory_space<vmem>>, vector<24x32xf32>
    %9 = arith.truncf %8 : vector<24x32xf32> to vector<24x32xbf16>
    %c0_9 = arith.constant 0 : index
    %c0_10 = arith.constant 0 : index
    %10 = vector.load %arg3[%c0_9, %c0_10] : memref<160x64xbf16, #tpu.memory_space<vmem>>, vector<32x64xbf16>
    %cst = arith.constant dense<0.000000e+00> : vector<24x64xf32>
    %11 = tpu.matmul %9, %10, %cst {dimension_numbers = #tpu.dot_dimension_numbers<[1], [0], [0], [1], [0, 0, 1, 1], [], []>} : vector<24x32xbf16>, vector<32x64xbf16>, vector<24x64xf32> -> vector<24x64xf32>
    %12 = vector.broadcast %2 : vector<1x64xf32> to vector<24x64xf32>
    %13 = arith.addf %11, %12 : vector<24x64xf32>
    %cst_11 = arith.constant 0.000000e+00 : f32
    %14 = vector.broadcast %cst_11 : f32 to vector<24x64xf32>
    %15 = arith.maximumf %13, %14 : vector<24x64xf32>
    %16 = arith.truncf %15 : vector<24x64xf32> to vector<24x64xbf16>
    %cst_12 = arith.constant dense<0.000000e+00> : vector<2x64xf32>
    %17 = tpu.matmul %7, %16, %cst_12 {dimension_numbers = #tpu.dot_dimension_numbers<[1], [0], [0], [1], [0, 0, 1, 1], [], []>} : vector<2x24xbf16>, vector<24x64xbf16>, vector<2x64xf32> -> vector<2x64xf32>
    %c0_13 = arith.constant 0 : index
    %c0_14 = arith.constant 0 : index
    %18 = vector.load %arg1[%c0_13, %c0_14] : memref<32x12xf32, #tpu.memory_space<vmem>>, vector<32x12xf32>
    %19 = arith.truncf %18 : vector<32x12xf32> to vector<32x12xbf16>
    %c0_15 = arith.constant 0 : index
    %c0_16 = arith.constant 0 : index
    %20 = vector.load %arg4[%c0_15, %c0_16] : memref<144x32xbf16, #tpu.memory_space<vmem>>, vector<12x32xbf16>
    %cst_17 = arith.constant dense<0.000000e+00> : vector<32x32xf32>
    %21 = tpu.matmul %19, %20, %cst_17 {dimension_numbers = #tpu.dot_dimension_numbers<[1], [0], [0], [1], [0, 0, 1, 1], [], []>} : vector<32x12xbf16>, vector<12x32xbf16>, vector<32x32xf32> -> vector<32x32xf32>
    %22 = vector.broadcast %4 : vector<1x32xf32> to vector<32x32xf32>
    %23 = arith.addf %21, %22 : vector<32x32xf32>
    %cst_18 = arith.constant 0.000000e+00 : f32
    %24 = vector.broadcast %cst_18 : f32 to vector<32x32xf32>
    %25 = arith.maximumf %23, %24 : vector<32x32xf32>
    %26 = arith.truncf %25 : vector<32x32xf32> to vector<32x32xbf16>
    %c0_19 = arith.constant 0 : index
    %c0_20 = arith.constant 0 : index
    %27 = vector.load %arg2[%c0_19, %c0_20] : memref<160x256xbf16, #tpu.memory_space<vmem>>, vector<32x256xbf16>
    %cst_21 = arith.constant dense<0.000000e+00> : vector<32x256xf32>
    %28 = tpu.matmul %26, %27, %cst_21 {dimension_numbers = #tpu.dot_dimension_numbers<[1], [0], [0], [1], [0, 0, 1, 1], [], []>} : vector<32x32xbf16>, vector<32x256xbf16>, vector<32x256xf32> -> vector<32x256xf32>
    %29 = vector.broadcast %0 : vector<1x256xf32> to vector<32x256xf32>
    %30 = arith.addf %28, %29 : vector<32x256xf32>
    %c0_22 = arith.constant 0 : index
    %c0_23 = arith.constant 0 : index
    %31 = vector.load %arg7[%c0_22, %c0_23] : memref<32x256xf32, #tpu.memory_space<vmem>>, vector<32x256xf32>
    tpu.vector_store %arg7[%c0_22, %c0_23], %30 {strides = array<i32>} : memref<32x256xf32, #tpu.memory_space<vmem>>, vector<32x256xf32>,
    %cst_24 = arith.constant 0.000000e+00 : f32
    %32 = vector.broadcast %cst_24 : f32 to vector<2x64xf32>
    %cst_25 = arith.constant 0.000000e+00 : f32
    %33 = vector.broadcast %cst_25 : f32 to vector<2x64xf32>
    %c0_26 = arith.constant 0 : index
    %c0_27 = arith.constant 0 : index
    %34 = vector.load %arg7[%c0_26, %c0_27] : memref<32x256xf32, #tpu.memory_space<vmem>>, vector<2x256xf32>
    %35 = arith.truncf %32 : vector<2x64xf32> to vector<2x64xbf16>
    %c32 = arith.constant 32 : index
    %c0_28 = arith.constant 0 : index
    %36 = vector.load %arg2[%c32, %c0_28] : memref<160x256xbf16, #tpu.memory_space<vmem>>, vector<64x256xbf16>
    %cst_29 = arith.constant dense<0.000000e+00> : vector<2x256xf32>
    %37 = tpu.matmul %35, %36, %cst_29 {dimension_numbers = #tpu.dot_dimension_numbers<[1], [0], [0], [1], [0, 0, 1, 1], [], []>} : vector<2x64xbf16>, vector<64x256xbf16>, vector<2x256xf32> -> vector<2x256xf32>
    %38 = arith.addf %34, %37 : vector<2x256xf32>
    %39 = vector.extract_strided_slice %38 {offsets = [0, 0], sizes = [2, 192], strides = [1, 1]} : vector<2x256xf32> to vector<2x192xf32>
    %40 = arith.negf %39 : vector<2x192xf32>
    %41 = math.exp %40 : vector<2x192xf32>
    %cst_30 = arith.constant 1.000000e+00 : f32
    %42 = vector.broadcast %cst_30 : f32 to vector<2x192xf32>
    %43 = arith.addf %42, %41 : vector<2x192xf32>
    %44 = arith.divf %42, %43 : vector<2x192xf32>
    %45 = vector.extract_strided_slice %38 {offsets = [0, 192], sizes = [2, 64], strides = [1, 1]} : vector<2x256xf32> to vector<2x64xf32>
    %46 = math.tanh %45 : vector<2x64xf32>
    %47 = vector.extract_strided_slice %44 {offsets = [0, 64], sizes = [2, 64], strides = [1, 1]} : vector<2x192xf32> to vector<2x64xf32>
    %48 = arith.mulf %47, %33 : vector<2x64xf32>
    %49 = vector.extract_strided_slice %44 {offsets = [0, 0], sizes = [2, 64], strides = [1, 1]} : vector<2x192xf32> to vector<2x64xf32>
    %50 = arith.mulf %49, %46 : vector<2x64xf32>
    %51 = arith.addf %48, %50 : vector<2x64xf32>
    %52 = vector.extract_strided_slice %44 {offsets = [0, 128], sizes = [2, 64], strides = [1, 1]} : vector<2x192xf32> to vector<2x64xf32>
    %53 = math.tanh %51 : vector<2x64xf32>
    %54 = arith.mulf %52, %53 : vector<2x64xf32>
    %c2_31 = arith.constant 2 : index
    %c0_32 = arith.constant 0 : index
    %55 = vector.load %arg7[%c2_31, %c0_32] : memref<32x256xf32, #tpu.memory_space<vmem>>, vector<2x256xf32>
    %56 = arith.truncf %54 : vector<2x64xf32> to vector<2x64xbf16>
    %c32_33 = arith.constant 32 : index
    %c0_34 = arith.constant 0 : index
    %57 = vector.load %arg2[%c32_33, %c0_34] : memref<160x256xbf16, #tpu.memory_space<vmem>>, vector<64x256xbf16>
    %cst_35 = arith.constant dense<0.000000e+00> : vector<2x256xf32>
    %58 = tpu.matmul %56, %57, %cst_35 {dimension_numbers = #tpu.dot_dimension_numbers<[1], [0], [0], [1], [0, 0, 1, 1], [], []>} : vector<2x64xbf16>, vector<64x256xbf16>, vector<2x256xf32> -> vector<2x256xf32>
    %59 = arith.addf %55, %58 : vector<2x256xf32>
    %60 = vector.extract_strided_slice %59 {offsets = [0, 0], sizes = [2, 192], strides = [1, 1]} : vector<2x256xf32> to vector<2x192xf32>
    %61 = arith.negf %60 : vector<2x192xf32>
    %62 = math.exp %61 : vector<2x192xf32>
    %cst_36 = arith.constant 1.000000e+00 : f32
    %63 = vector.broadcast %cst_36 : f32 to vector<2x192xf32>
    %64 = arith.addf %63, %62 : vector<2x192xf32>
    %65 = arith.divf %63, %64 : vector<2x192xf32>
    %66 = vector.extract_strided_slice %59 {offsets = [0, 192], sizes = [2, 64], strides = [1, 1]} : vector<2x256xf32> to vector<2x64xf32>
    %67 = math.tanh %66 : vector<2x64xf32>
    %68 = vector.extract_strided_slice %65 {offsets = [0, 64], sizes = [2, 64], strides = [1, 1]} : vector<2x192xf32> to vector<2x64xf32>
    %69 = arith.mulf %68, %51 : vector<2x64xf32>
    %70 = vector.extract_strided_slice %65 {offsets = [0, 0], sizes = [2, 64], strides = [1, 1]} : vector<2x192xf32> to vector<2x64xf32>
    %71 = arith.mulf %70, %67 : vector<2x64xf32>
    %72 = arith.addf %69, %71 : vector<2x64xf32>
    %73 = vector.extract_strided_slice %65 {offsets = [0, 128], sizes = [2, 64], strides = [1, 1]} : vector<2x192xf32> to vector<2x64xf32>
    %74 = math.tanh %72 : vector<2x64xf32>
    %75 = arith.mulf %73, %74 : vector<2x64xf32>
    %c4_37 = arith.constant 4 : index
    %c0_38 = arith.constant 0 : index
    %76 = vector.load %arg7[%c4_37, %c0_38] : memref<32x256xf32, #tpu.memory_space<vmem>>, vector<2x256xf32>
    %77 = arith.truncf %75 : vector<2x64xf32> to vector<2x64xbf16>
    %c32_39 = arith.constant 32 : index
    %c0_40 = arith.constant 0 : index
    %78 = vector.load %arg2[%c32_39, %c0_40] : memref<160x256xbf16, #tpu.memory_space<vmem>>, vector<64x256xbf16>
    %cst_41 = arith.constant dense<0.000000e+00> : vector<2x256xf32>
    %79 = tpu.matmul %77, %78, %cst_41 {dimension_numbers = #tpu.dot_dimension_numbers<[1], [0], [0], [1], [0, 0, 1, 1], [], []>} : vector<2x64xbf16>, vector<64x256xbf16>, vector<2x256xf32> -> vector<2x256xf32>
    %80 = arith.addf %76, %79 : vector<2x256xf32>
    %81 = vector.extract_strided_slice %80 {offsets = [0, 0], sizes = [2, 192], strides = [1, 1]} : vector<2x256xf32> to vector<2x192xf32>
    %82 = arith.negf %81 : vector<2x192xf32>
    %83 = math.exp %82 : vector<2x192xf32>
    %cst_42 = arith.constant 1.000000e+00 : f32
    %84 = vector.broadcast %cst_42 : f32 to vector<2x192xf32>
    %85 = arith.addf %84, %83 : vector<2x192xf32>
    %86 = arith.divf %84, %85 : vector<2x192xf32>
    %87 = vector.extract_strided_slice %80 {offsets = [0, 192], sizes = [2, 64], strides = [1, 1]} : vector<2x256xf32> to vector<2x64xf32>
    %88 = math.tanh %87 : vector<2x64xf32>
    %89 = vector.extract_strided_slice %86 {offsets = [0, 64], sizes = [2, 64], strides = [1, 1]} : vector<2x192xf32> to vector<2x64xf32>
    %90 = arith.mulf %89, %72 : vector<2x64xf32>
    %91 = vector.extract_strided_slice %86 {offsets = [0, 0], sizes = [2, 64], strides = [1, 1]} : vector<2x192xf32> to vector<2x64xf32>
    %92 = arith.mulf %91, %88 : vector<2x64xf32>
    %93 = arith.addf %90, %92 : vector<2x64xf32>
    %94 = vector.extract_strided_slice %86 {offsets = [0, 128], sizes = [2, 64], strides = [1, 1]} : vector<2x192xf32> to vector<2x64xf32>
    %95 = math.tanh %93 : vector<2x64xf32>
    %96 = arith.mulf %94, %95 : vector<2x64xf32>
    %c6_43 = arith.constant 6 : index
    %c0_44 = arith.constant 0 : index
    %97 = vector.load %arg7[%c6_43, %c0_44] : memref<32x256xf32, #tpu.memory_space<vmem>>, vector<2x256xf32>
    %98 = arith.truncf %96 : vector<2x64xf32> to vector<2x64xbf16>
    %c32_45 = arith.constant 32 : index
    %c0_46 = arith.constant 0 : index
    %99 = vector.load %arg2[%c32_45, %c0_46] : memref<160x256xbf16, #tpu.memory_space<vmem>>, vector<64x256xbf16>
    %cst_47 = arith.constant dense<0.000000e+00> : vector<2x256xf32>
    %100 = tpu.matmul %98, %99, %cst_47 {dimension_numbers = #tpu.dot_dimension_numbers<[1], [0], [0], [1], [0, 0, 1, 1], [], []>} : vector<2x64xbf16>, vector<64x256xbf16>, vector<2x256xf32> -> vector<2x256xf32>
    %101 = arith.addf %97, %100 : vector<2x256xf32>
    %102 = vector.extract_strided_slice %101 {offsets = [0, 0], sizes = [2, 192], strides = [1, 1]} : vector<2x256xf32> to vector<2x192xf32>
    %103 = arith.negf %102 : vector<2x192xf32>
    %104 = math.exp %103 : vector<2x192xf32>
    %cst_48 = arith.constant 1.000000e+00 : f32
    %105 = vector.broadcast %cst_48 : f32 to vector<2x192xf32>
    %106 = arith.addf %105, %104 : vector<2x192xf32>
    %107 = arith.divf %105, %106 : vector<2x192xf32>
    %108 = vector.extract_strided_slice %101 {offsets = [0, 192], sizes = [2, 64], strides = [1, 1]} : vector<2x256xf32> to vector<2x64xf32>
    %109 = math.tanh %108 : vector<2x64xf32>
    %110 = vector.extract_strided_slice %107 {offsets = [0, 64], sizes = [2, 64], strides = [1, 1]} : vector<2x192xf32> to vector<2x64xf32>
    %111 = arith.mulf %110, %93 : vector<2x64xf32>
    %112 = vector.extract_strided_slice %107 {offsets = [0, 0], sizes = [2, 64], strides = [1, 1]} : vector<2x192xf32> to vector<2x64xf32>
    %113 = arith.mulf %112, %109 : vector<2x64xf32>
    %114 = arith.addf %111, %113 : vector<2x64xf32>
    %115 = vector.extract_strided_slice %107 {offsets = [0, 128], sizes = [2, 64], strides = [1, 1]} : vector<2x192xf32> to vector<2x64xf32>
    %116 = math.tanh %114 : vector<2x64xf32>
    %117 = arith.mulf %115, %116 : vector<2x64xf32>
    %c8 = arith.constant 8 : index
    %c0_49 = arith.constant 0 : index
    %118 = vector.load %arg7[%c8, %c0_49] : memref<32x256xf32, #tpu.memory_space<vmem>>, vector<2x256xf32>
    %119 = arith.truncf %117 : vector<2x64xf32> to vector<2x64xbf16>
    %c32_50 = arith.constant 32 : index
    %c0_51 = arith.constant 0 : index
    %120 = vector.load %arg2[%c32_50, %c0_51] : memref<160x256xbf16, #tpu.memory_space<vmem>>, vector<64x256xbf16>
    %cst_52 = arith.constant dense<0.000000e+00> : vector<2x256xf32>
    %121 = tpu.matmul %119, %120, %cst_52 {dimension_numbers = #tpu.dot_dimension_numbers<[1], [0], [0], [1], [0, 0, 1, 1], [], []>} : vector<2x64xbf16>, vector<64x256xbf16>, vector<2x256xf32> -> vector<2x256xf32>
    %122 = arith.addf %118, %121 : vector<2x256xf32>
    %123 = vector.extract_strided_slice %122 {offsets = [0, 0], sizes = [2, 192], strides = [1, 1]} : vector<2x256xf32> to vector<2x192xf32>
    %124 = arith.negf %123 : vector<2x192xf32>
    %125 = math.exp %124 : vector<2x192xf32>
    %cst_53 = arith.constant 1.000000e+00 : f32
    %126 = vector.broadcast %cst_53 : f32 to vector<2x192xf32>
    %127 = arith.addf %126, %125 : vector<2x192xf32>
    %128 = arith.divf %126, %127 : vector<2x192xf32>
    %129 = vector.extract_strided_slice %122 {offsets = [0, 192], sizes = [2, 64], strides = [1, 1]} : vector<2x256xf32> to vector<2x64xf32>
    %130 = math.tanh %129 : vector<2x64xf32>
    %131 = vector.extract_strided_slice %128 {offsets = [0, 64], sizes = [2, 64], strides = [1, 1]} : vector<2x192xf32> to vector<2x64xf32>
    %132 = arith.mulf %131, %114 : vector<2x64xf32>
    %133 = vector.extract_strided_slice %128 {offsets = [0, 0], sizes = [2, 64], strides = [1, 1]} : vector<2x192xf32> to vector<2x64xf32>
    %134 = arith.mulf %133, %130 : vector<2x64xf32>
    %135 = arith.addf %132, %134 : vector<2x64xf32>
    %136 = vector.extract_strided_slice %128 {offsets = [0, 128], sizes = [2, 64], strides = [1, 1]} : vector<2x192xf32> to vector<2x64xf32>
    %137 = math.tanh %135 : vector<2x64xf32>
    %138 = arith.mulf %136, %137 : vector<2x64xf32>
    %c10 = arith.constant 10 : index
    %c0_54 = arith.constant 0 : index
    %139 = vector.load %arg7[%c10, %c0_54] : memref<32x256xf32, #tpu.memory_space<vmem>>, vector<2x256xf32>
    %140 = arith.truncf %138 : vector<2x64xf32> to vector<2x64xbf16>
    %c32_55 = arith.constant 32 : index
    %c0_56 = arith.constant 0 : index
    %141 = vector.load %arg2[%c32_55, %c0_56] : memref<160x256xbf16, #tpu.memory_space<vmem>>, vector<64x256xbf16>
    %cst_57 = arith.constant dense<0.000000e+00> : vector<2x256xf32>
    %142 = tpu.matmul %140, %141, %cst_57 {dimension_numbers = #tpu.dot_dimension_numbers<[1], [0], [0], [1], [0, 0, 1, 1], [], []>} : vector<2x64xbf16>, vector<64x256xbf16>, vector<2x256xf32> -> vector<2x256xf32>
    %143 = arith.addf %139, %142 : vector<2x256xf32>
    %144 = vector.extract_strided_slice %143 {offsets = [0, 0], sizes = [2, 192], strides = [1, 1]} : vector<2x256xf32> to vector<2x192xf32>
    %145 = arith.negf %144 : vector<2x192xf32>
    %146 = math.exp %145 : vector<2x192xf32>
    %cst_58 = arith.constant 1.000000e+00 : f32
    %147 = vector.broadcast %cst_58 : f32 to vector<2x192xf32>
    %148 = arith.addf %147, %146 : vector<2x192xf32>
    %149 = arith.divf %147, %148 : vector<2x192xf32>
    %150 = vector.extract_strided_slice %143 {offsets = [0, 192], sizes = [2, 64], strides = [1, 1]} : vector<2x256xf32> to vector<2x64xf32>
    %151 = math.tanh %150 : vector<2x64xf32>
    %152 = vector.extract_strided_slice %149 {offsets = [0, 64], sizes = [2, 64], strides = [1, 1]} : vector<2x192xf32> to vector<2x64xf32>
    %153 = arith.mulf %152, %135 : vector<2x64xf32>
    %154 = vector.extract_strided_slice %149 {offsets = [0, 0], sizes = [2, 64], strides = [1, 1]} : vector<2x192xf32> to vector<2x64xf32>
    %155 = arith.mulf %154, %151 : vector<2x64xf32>
    %156 = arith.addf %153, %155 : vector<2x64xf32>
    %157 = vector.extract_strided_slice %149 {offsets = [0, 128], sizes = [2, 64], strides = [1, 1]} : vector<2x192xf32> to vector<2x64xf32>
    %158 = math.tanh %156 : vector<2x64xf32>
    %159 = arith.mulf %157, %158 : vector<2x64xf32>
    %c12 = arith.constant 12 : index
    %c0_59 = arith.constant 0 : index
    %160 = vector.load %arg7[%c12, %c0_59] : memref<32x256xf32, #tpu.memory_space<vmem>>, vector<2x256xf32>
    %161 = arith.truncf %159 : vector<2x64xf32> to vector<2x64xbf16>
    %c32_60 = arith.constant 32 : index
    %c0_61 = arith.constant 0 : index
    %162 = vector.load %arg2[%c32_60, %c0_61] : memref<160x256xbf16, #tpu.memory_space<vmem>>, vector<64x256xbf16>
    %cst_62 = arith.constant dense<0.000000e+00> : vector<2x256xf32>
    %163 = tpu.matmul %161, %162, %cst_62 {dimension_numbers = #tpu.dot_dimension_numbers<[1], [0], [0], [1], [0, 0, 1, 1], [], []>} : vector<2x64xbf16>, vector<64x256xbf16>, vector<2x256xf32> -> vector<2x256xf32>
    %164 = arith.addf %160, %163 : vector<2x256xf32>
    %165 = vector.extract_strided_slice %164 {offsets = [0, 0], sizes = [2, 192], strides = [1, 1]} : vector<2x256xf32> to vector<2x192xf32>
    %166 = arith.negf %165 : vector<2x192xf32>
    %167 = math.exp %166 : vector<2x192xf32>
    %cst_63 = arith.constant 1.000000e+00 : f32
    %168 = vector.broadcast %cst_63 : f32 to vector<2x192xf32>
    %169 = arith.addf %168, %167 : vector<2x192xf32>
    %170 = arith.divf %168, %169 : vector<2x192xf32>
    %171 = vector.extract_strided_slice %164 {offsets = [0, 192], sizes = [2, 64], strides = [1, 1]} : vector<2x256xf32> to vector<2x64xf32>
    %172 = math.tanh %171 : vector<2x64xf32>
    %173 = vector.extract_strided_slice %170 {offsets = [0, 64], sizes = [2, 64], strides = [1, 1]} : vector<2x192xf32> to vector<2x64xf32>
    %174 = arith.mulf %173, %156 : vector<2x64xf32>
    %175 = vector.extract_strided_slice %170 {offsets = [0, 0], sizes = [2, 64], strides = [1, 1]} : vector<2x192xf32> to vector<2x64xf32>
    %176 = arith.mulf %175, %172 : vector<2x64xf32>
    %177 = arith.addf %174, %176 : vector<2x64xf32>
    %178 = vector.extract_strided_slice %170 {offsets = [0, 128], sizes = [2, 64], strides = [1, 1]} : vector<2x192xf32> to vector<2x64xf32>
    %179 = math.tanh %177 : vector<2x64xf32>
    %180 = arith.mulf %178, %179 : vector<2x64xf32>
    %c14 = arith.constant 14 : index
    %c0_64 = arith.constant 0 : index
    %181 = vector.load %arg7[%c14, %c0_64] : memref<32x256xf32, #tpu.memory_space<vmem>>, vector<2x256xf32>
    %182 = arith.truncf %180 : vector<2x64xf32> to vector<2x64xbf16>
    %c32_65 = arith.constant 32 : index
    %c0_66 = arith.constant 0 : index
    %183 = vector.load %arg2[%c32_65, %c0_66] : memref<160x256xbf16, #tpu.memory_space<vmem>>, vector<64x256xbf16>
    %cst_67 = arith.constant dense<0.000000e+00> : vector<2x256xf32>
    %184 = tpu.matmul %182, %183, %cst_67 {dimension_numbers = #tpu.dot_dimension_numbers<[1], [0], [0], [1], [0, 0, 1, 1], [], []>} : vector<2x64xbf16>, vector<64x256xbf16>, vector<2x256xf32> -> vector<2x256xf32>
    %185 = arith.addf %181, %184 : vector<2x256xf32>
    %186 = vector.extract_strided_slice %185 {offsets = [0, 0], sizes = [2, 192], strides = [1, 1]} : vector<2x256xf32> to vector<2x192xf32>
    %187 = arith.negf %186 : vector<2x192xf32>
    %188 = math.exp %187 : vector<2x192xf32>
    %cst_68 = arith.constant 1.000000e+00 : f32
    %189 = vector.broadcast %cst_68 : f32 to vector<2x192xf32>
    %190 = arith.addf %189, %188 : vector<2x192xf32>
    %191 = arith.divf %189, %190 : vector<2x192xf32>
    %192 = vector.extract_strided_slice %185 {offsets = [0, 192], sizes = [2, 64], strides = [1, 1]} : vector<2x256xf32> to vector<2x64xf32>
    %193 = math.tanh %192 : vector<2x64xf32>
    %194 = vector.extract_strided_slice %191 {offsets = [0, 64], sizes = [2, 64], strides = [1, 1]} : vector<2x192xf32> to vector<2x64xf32>
    %195 = arith.mulf %194, %177 : vector<2x64xf32>
    %196 = vector.extract_strided_slice %191 {offsets = [0, 0], sizes = [2, 64], strides = [1, 1]} : vector<2x192xf32> to vector<2x64xf32>
    %197 = arith.mulf %196, %193 : vector<2x64xf32>
    %198 = arith.addf %195, %197 : vector<2x64xf32>
    %199 = vector.extract_strided_slice %191 {offsets = [0, 128], sizes = [2, 64], strides = [1, 1]} : vector<2x192xf32> to vector<2x64xf32>
    %200 = math.tanh %198 : vector<2x64xf32>
    %201 = arith.mulf %199, %200 : vector<2x64xf32>
    %c16 = arith.constant 16 : index
    %c0_69 = arith.constant 0 : index
    %202 = vector.load %arg7[%c16, %c0_69] : memref<32x256xf32, #tpu.memory_space<vmem>>, vector<2x256xf32>
    %203 = arith.truncf %201 : vector<2x64xf32> to vector<2x64xbf16>
    %c32_70 = arith.constant 32 : index
    %c0_71 = arith.constant 0 : index
    %204 = vector.load %arg2[%c32_70, %c0_71] : memref<160x256xbf16, #tpu.memory_space<vmem>>, vector<64x256xbf16>
    %cst_72 = arith.constant dense<0.000000e+00> : vector<2x256xf32>
    %205 = tpu.matmul %203, %204, %cst_72 {dimension_numbers = #tpu.dot_dimension_numbers<[1], [0], [0], [1], [0, 0, 1, 1], [], []>} : vector<2x64xbf16>, vector<64x256xbf16>, vector<2x256xf32> -> vector<2x256xf32>
    %206 = arith.addf %202, %205 : vector<2x256xf32>
    %207 = vector.extract_strided_slice %206 {offsets = [0, 0], sizes = [2, 192], strides = [1, 1]} : vector<2x256xf32> to vector<2x192xf32>
    %208 = arith.negf %207 : vector<2x192xf32>
    %209 = math.exp %208 : vector<2x192xf32>
    %cst_73 = arith.constant 1.000000e+00 : f32
    %210 = vector.broadcast %cst_73 : f32 to vector<2x192xf32>
    %211 = arith.addf %210, %209 : vector<2x192xf32>
    %212 = arith.divf %210, %211 : vector<2x192xf32>
    %213 = vector.extract_strided_slice %206 {offsets = [0, 192], sizes = [2, 64], strides = [1, 1]} : vector<2x256xf32> to vector<2x64xf32>
    %214 = math.tanh %213 : vector<2x64xf32>
    %215 = vector.extract_strided_slice %212 {offsets = [0, 64], sizes = [2, 64], strides = [1, 1]} : vector<2x192xf32> to vector<2x64xf32>
    %216 = arith.mulf %215, %198 : vector<2x64xf32>
    %217 = vector.extract_strided_slice %212 {offsets = [0, 0], sizes = [2, 64], strides = [1, 1]} : vector<2x192xf32> to vector<2x64xf32>
    %218 = arith.mulf %217, %214 : vector<2x64xf32>
    %219 = arith.addf %216, %218 : vector<2x64xf32>
    %220 = vector.extract_strided_slice %212 {offsets = [0, 128], sizes = [2, 64], strides = [1, 1]} : vector<2x192xf32> to vector<2x64xf32>
    %221 = math.tanh %219 : vector<2x64xf32>
    %222 = arith.mulf %220, %221 : vector<2x64xf32>
    %c18 = arith.constant 18 : index
    %c0_74 = arith.constant 0 : index
    %223 = vector.load %arg7[%c18, %c0_74] : memref<32x256xf32, #tpu.memory_space<vmem>>, vector<2x256xf32>
    %224 = arith.truncf %222 : vector<2x64xf32> to vector<2x64xbf16>
    %c32_75 = arith.constant 32 : index
    %c0_76 = arith.constant 0 : index
    %225 = vector.load %arg2[%c32_75, %c0_76] : memref<160x256xbf16, #tpu.memory_space<vmem>>, vector<64x256xbf16>
    %cst_77 = arith.constant dense<0.000000e+00> : vector<2x256xf32>
    %226 = tpu.matmul %224, %225, %cst_77 {dimension_numbers = #tpu.dot_dimension_numbers<[1], [0], [0], [1], [0, 0, 1, 1], [], []>} : vector<2x64xbf16>, vector<64x256xbf16>, vector<2x256xf32> -> vector<2x256xf32>
    %227 = arith.addf %223, %226 : vector<2x256xf32>
    %228 = vector.extract_strided_slice %227 {offsets = [0, 0], sizes = [2, 192], strides = [1, 1]} : vector<2x256xf32> to vector<2x192xf32>
    %229 = arith.negf %228 : vector<2x192xf32>
    %230 = math.exp %229 : vector<2x192xf32>
    %cst_78 = arith.constant 1.000000e+00 : f32
    %231 = vector.broadcast %cst_78 : f32 to vector<2x192xf32>
    %232 = arith.addf %231, %230 : vector<2x192xf32>
    %233 = arith.divf %231, %232 : vector<2x192xf32>
    %234 = vector.extract_strided_slice %227 {offsets = [0, 192], sizes = [2, 64], strides = [1, 1]} : vector<2x256xf32> to vector<2x64xf32>
    %235 = math.tanh %234 : vector<2x64xf32>
    %236 = vector.extract_strided_slice %233 {offsets = [0, 64], sizes = [2, 64], strides = [1, 1]} : vector<2x192xf32> to vector<2x64xf32>
    %237 = arith.mulf %236, %219 : vector<2x64xf32>
    %238 = vector.extract_strided_slice %233 {offsets = [0, 0], sizes = [2, 64], strides = [1, 1]} : vector<2x192xf32> to vector<2x64xf32>
    %239 = arith.mulf %238, %235 : vector<2x64xf32>
    %240 = arith.addf %237, %239 : vector<2x64xf32>
    %241 = vector.extract_strided_slice %233 {offsets = [0, 128], sizes = [2, 64], strides = [1, 1]} : vector<2x192xf32> to vector<2x64xf32>
    %242 = math.tanh %240 : vector<2x64xf32>
    %243 = arith.mulf %241, %242 : vector<2x64xf32>
    %c20 = arith.constant 20 : index
    %c0_79 = arith.constant 0 : index
    %244 = vector.load %arg7[%c20, %c0_79] : memref<32x256xf32, #tpu.memory_space<vmem>>, vector<2x256xf32>
    %245 = arith.truncf %243 : vector<2x64xf32> to vector<2x64xbf16>
    %c32_80 = arith.constant 32 : index
    %c0_81 = arith.constant 0 : index
    %246 = vector.load %arg2[%c32_80, %c0_81] : memref<160x256xbf16, #tpu.memory_space<vmem>>, vector<64x256xbf16>
    %cst_82 = arith.constant dense<0.000000e+00> : vector<2x256xf32>
    %247 = tpu.matmul %245, %246, %cst_82 {dimension_numbers = #tpu.dot_dimension_numbers<[1], [0], [0], [1], [0, 0, 1, 1], [], []>} : vector<2x64xbf16>, vector<64x256xbf16>, vector<2x256xf32> -> vector<2x256xf32>
    %248 = arith.addf %244, %247 : vector<2x256xf32>
    %249 = vector.extract_strided_slice %248 {offsets = [0, 0], sizes = [2, 192], strides = [1, 1]} : vector<2x256xf32> to vector<2x192xf32>
    %250 = arith.negf %249 : vector<2x192xf32>
    %251 = math.exp %250 : vector<2x192xf32>
    %cst_83 = arith.constant 1.000000e+00 : f32
    %252 = vector.broadcast %cst_83 : f32 to vector<2x192xf32>
    %253 = arith.addf %252, %251 : vector<2x192xf32>
    %254 = arith.divf %252, %253 : vector<2x192xf32>
    %255 = vector.extract_strided_slice %248 {offsets = [0, 192], sizes = [2, 64], strides = [1, 1]} : vector<2x256xf32> to vector<2x64xf32>
    %256 = math.tanh %255 : vector<2x64xf32>
    %257 = vector.extract_strided_slice %254 {offsets = [0, 64], sizes = [2, 64], strides = [1, 1]} : vector<2x192xf32> to vector<2x64xf32>
    %258 = arith.mulf %257, %240 : vector<2x64xf32>
    %259 = vector.extract_strided_slice %254 {offsets = [0, 0], sizes = [2, 64], strides = [1, 1]} : vector<2x192xf32> to vector<2x64xf32>
    %260 = arith.mulf %259, %256 : vector<2x64xf32>
    %261 = arith.addf %258, %260 : vector<2x64xf32>
    %262 = vector.extract_strided_slice %254 {offsets = [0, 128], sizes = [2, 64], strides = [1, 1]} : vector<2x192xf32> to vector<2x64xf32>
    %263 = math.tanh %261 : vector<2x64xf32>
    %264 = arith.mulf %262, %263 : vector<2x64xf32>
    %c22 = arith.constant 22 : index
    %c0_84 = arith.constant 0 : index
    %265 = vector.load %arg7[%c22, %c0_84] : memref<32x256xf32, #tpu.memory_space<vmem>>, vector<2x256xf32>
    %266 = arith.truncf %264 : vector<2x64xf32> to vector<2x64xbf16>
    %c32_85 = arith.constant 32 : index
    %c0_86 = arith.constant 0 : index
    %267 = vector.load %arg2[%c32_85, %c0_86] : memref<160x256xbf16, #tpu.memory_space<vmem>>, vector<64x256xbf16>
    %cst_87 = arith.constant dense<0.000000e+00> : vector<2x256xf32>
    %268 = tpu.matmul %266, %267, %cst_87 {dimension_numbers = #tpu.dot_dimension_numbers<[1], [0], [0], [1], [0, 0, 1, 1], [], []>} : vector<2x64xbf16>, vector<64x256xbf16>, vector<2x256xf32> -> vector<2x256xf32>
    %269 = arith.addf %265, %268 : vector<2x256xf32>
    %270 = vector.extract_strided_slice %269 {offsets = [0, 0], sizes = [2, 192], strides = [1, 1]} : vector<2x256xf32> to vector<2x192xf32>
    %271 = arith.negf %270 : vector<2x192xf32>
    %272 = math.exp %271 : vector<2x192xf32>
    %cst_88 = arith.constant 1.000000e+00 : f32
    %273 = vector.broadcast %cst_88 : f32 to vector<2x192xf32>
    %274 = arith.addf %273, %272 : vector<2x192xf32>
    %275 = arith.divf %273, %274 : vector<2x192xf32>
    %276 = vector.extract_strided_slice %269 {offsets = [0, 192], sizes = [2, 64], strides = [1, 1]} : vector<2x256xf32> to vector<2x64xf32>
    %277 = math.tanh %276 : vector<2x64xf32>
    %278 = vector.extract_strided_slice %275 {offsets = [0, 64], sizes = [2, 64], strides = [1, 1]} : vector<2x192xf32> to vector<2x64xf32>
    %279 = arith.mulf %278, %261 : vector<2x64xf32>
    %280 = vector.extract_strided_slice %275 {offsets = [0, 0], sizes = [2, 64], strides = [1, 1]} : vector<2x192xf32> to vector<2x64xf32>
    %281 = arith.mulf %280, %277 : vector<2x64xf32>
    %282 = arith.addf %279, %281 : vector<2x64xf32>
    %283 = vector.extract_strided_slice %275 {offsets = [0, 128], sizes = [2, 64], strides = [1, 1]} : vector<2x192xf32> to vector<2x64xf32>
    %284 = math.tanh %282 : vector<2x64xf32>
    %285 = arith.mulf %283, %284 : vector<2x64xf32>
    %c24 = arith.constant 24 : index
    %c0_89 = arith.constant 0 : index
    %286 = vector.load %arg7[%c24, %c0_89] : memref<32x256xf32, #tpu.memory_space<vmem>>, vector<2x256xf32>
    %287 = arith.truncf %285 : vector<2x64xf32> to vector<2x64xbf16>
    %c32_90 = arith.constant 32 : index
    %c0_91 = arith.constant 0 : index
    %288 = vector.load %arg2[%c32_90, %c0_91] : memref<160x256xbf16, #tpu.memory_space<vmem>>, vector<64x256xbf16>
    %cst_92 = arith.constant dense<0.000000e+00> : vector<2x256xf32>
    %289 = tpu.matmul %287, %288, %cst_92 {dimension_numbers = #tpu.dot_dimension_numbers<[1], [0], [0], [1], [0, 0, 1, 1], [], []>} : vector<2x64xbf16>, vector<64x256xbf16>, vector<2x256xf32> -> vector<2x256xf32>
    %290 = arith.addf %286, %289 : vector<2x256xf32>
    %291 = vector.extract_strided_slice %290 {offsets = [0, 0], sizes = [2, 192], strides = [1, 1]} : vector<2x256xf32> to vector<2x192xf32>
    %292 = arith.negf %291 : vector<2x192xf32>
    %293 = math.exp %292 : vector<2x192xf32>
    %cst_93 = arith.constant 1.000000e+00 : f32
    %294 = vector.broadcast %cst_93 : f32 to vector<2x192xf32>
    %295 = arith.addf %294, %293 : vector<2x192xf32>
    %296 = arith.divf %294, %295 : vector<2x192xf32>
    %297 = vector.extract_strided_slice %290 {offsets = [0, 192], sizes = [2, 64], strides = [1, 1]} : vector<2x256xf32> to vector<2x64xf32>
    %298 = math.tanh %297 : vector<2x64xf32>
    %299 = vector.extract_strided_slice %296 {offsets = [0, 64], sizes = [2, 64], strides = [1, 1]} : vector<2x192xf32> to vector<2x64xf32>
    %300 = arith.mulf %299, %282 : vector<2x64xf32>
    %301 = vector.extract_strided_slice %296 {offsets = [0, 0], sizes = [2, 64], strides = [1, 1]} : vector<2x192xf32> to vector<2x64xf32>
    %302 = arith.mulf %301, %298 : vector<2x64xf32>
    %303 = arith.addf %300, %302 : vector<2x64xf32>
    %304 = vector.extract_strided_slice %296 {offsets = [0, 128], sizes = [2, 64], strides = [1, 1]} : vector<2x192xf32> to vector<2x64xf32>
    %305 = math.tanh %303 : vector<2x64xf32>
    %306 = arith.mulf %304, %305 : vector<2x64xf32>
    %c26 = arith.constant 26 : index
    %c0_94 = arith.constant 0 : index
    %307 = vector.load %arg7[%c26, %c0_94] : memref<32x256xf32, #tpu.memory_space<vmem>>, vector<2x256xf32>
    %308 = arith.truncf %306 : vector<2x64xf32> to vector<2x64xbf16>
    %c32_95 = arith.constant 32 : index
    %c0_96 = arith.constant 0 : index
    %309 = vector.load %arg2[%c32_95, %c0_96] : memref<160x256xbf16, #tpu.memory_space<vmem>>, vector<64x256xbf16>
    %cst_97 = arith.constant dense<0.000000e+00> : vector<2x256xf32>
    %310 = tpu.matmul %308, %309, %cst_97 {dimension_numbers = #tpu.dot_dimension_numbers<[1], [0], [0], [1], [0, 0, 1, 1], [], []>} : vector<2x64xbf16>, vector<64x256xbf16>, vector<2x256xf32> -> vector<2x256xf32>
    %311 = arith.addf %307, %310 : vector<2x256xf32>
    %312 = vector.extract_strided_slice %311 {offsets = [0, 0], sizes = [2, 192], strides = [1, 1]} : vector<2x256xf32> to vector<2x192xf32>
    %313 = arith.negf %312 : vector<2x192xf32>
    %314 = math.exp %313 : vector<2x192xf32>
    %cst_98 = arith.constant 1.000000e+00 : f32
    %315 = vector.broadcast %cst_98 : f32 to vector<2x192xf32>
    %316 = arith.addf %315, %314 : vector<2x192xf32>
    %317 = arith.divf %315, %316 : vector<2x192xf32>
    %318 = vector.extract_strided_slice %311 {offsets = [0, 192], sizes = [2, 64], strides = [1, 1]} : vector<2x256xf32> to vector<2x64xf32>
    %319 = math.tanh %318 : vector<2x64xf32>
    %320 = vector.extract_strided_slice %317 {offsets = [0, 64], sizes = [2, 64], strides = [1, 1]} : vector<2x192xf32> to vector<2x64xf32>
    %321 = arith.mulf %320, %303 : vector<2x64xf32>
    %322 = vector.extract_strided_slice %317 {offsets = [0, 0], sizes = [2, 64], strides = [1, 1]} : vector<2x192xf32> to vector<2x64xf32>
    %323 = arith.mulf %322, %319 : vector<2x64xf32>
    %324 = arith.addf %321, %323 : vector<2x64xf32>
    %325 = vector.extract_strided_slice %317 {offsets = [0, 128], sizes = [2, 64], strides = [1, 1]} : vector<2x192xf32> to vector<2x64xf32>
    %326 = math.tanh %324 : vector<2x64xf32>
    %327 = arith.mulf %325, %326 : vector<2x64xf32>
    %c28 = arith.constant 28 : index
    %c0_99 = arith.constant 0 : index
    %328 = vector.load %arg7[%c28, %c0_99] : memref<32x256xf32, #tpu.memory_space<vmem>>, vector<2x256xf32>
    %329 = arith.truncf %327 : vector<2x64xf32> to vector<2x64xbf16>
    %c32_100 = arith.constant 32 : index
    %c0_101 = arith.constant 0 : index
    %330 = vector.load %arg2[%c32_100, %c0_101] : memref<160x256xbf16, #tpu.memory_space<vmem>>, vector<64x256xbf16>
    %cst_102 = arith.constant dense<0.000000e+00> : vector<2x256xf32>
    %331 = tpu.matmul %329, %330, %cst_102 {dimension_numbers = #tpu.dot_dimension_numbers<[1], [0], [0], [1], [0, 0, 1, 1], [], []>} : vector<2x64xbf16>, vector<64x256xbf16>, vector<2x256xf32> -> vector<2x256xf32>
    %332 = arith.addf %328, %331 : vector<2x256xf32>
    %333 = vector.extract_strided_slice %332 {offsets = [0, 0], sizes = [2, 192], strides = [1, 1]} : vector<2x256xf32> to vector<2x192xf32>
    %334 = arith.negf %333 : vector<2x192xf32>
    %335 = math.exp %334 : vector<2x192xf32>
    %cst_103 = arith.constant 1.000000e+00 : f32
    %336 = vector.broadcast %cst_103 : f32 to vector<2x192xf32>
    %337 = arith.addf %336, %335 : vector<2x192xf32>
    %338 = arith.divf %336, %337 : vector<2x192xf32>
    %339 = vector.extract_strided_slice %332 {offsets = [0, 192], sizes = [2, 64], strides = [1, 1]} : vector<2x256xf32> to vector<2x64xf32>
    %340 = math.tanh %339 : vector<2x64xf32>
    %341 = vector.extract_strided_slice %338 {offsets = [0, 64], sizes = [2, 64], strides = [1, 1]} : vector<2x192xf32> to vector<2x64xf32>
    %342 = arith.mulf %341, %324 : vector<2x64xf32>
    %343 = vector.extract_strided_slice %338 {offsets = [0, 0], sizes = [2, 64], strides = [1, 1]} : vector<2x192xf32> to vector<2x64xf32>
    %344 = arith.mulf %343, %340 : vector<2x64xf32>
    %345 = arith.addf %342, %344 : vector<2x64xf32>
    %346 = vector.extract_strided_slice %338 {offsets = [0, 128], sizes = [2, 64], strides = [1, 1]} : vector<2x192xf32> to vector<2x64xf32>
    %347 = math.tanh %345 : vector<2x64xf32>
    %348 = arith.mulf %346, %347 : vector<2x64xf32>
    %c30 = arith.constant 30 : index
    %c0_104 = arith.constant 0 : index
    %349 = vector.load %arg7[%c30, %c0_104] : memref<32x256xf32, #tpu.memory_space<vmem>>, vector<2x256xf32>
    %350 = arith.truncf %348 : vector<2x64xf32> to vector<2x64xbf16>
    %c32_105 = arith.constant 32 : index
    %c0_106 = arith.constant 0 : index
    %351 = vector.load %arg2[%c32_105, %c0_106] : memref<160x256xbf16, #tpu.memory_space<vmem>>, vector<64x256xbf16>
    %cst_107 = arith.constant dense<0.000000e+00> : vector<2x256xf32>
    %352 = tpu.matmul %350, %351, %cst_107 {dimension_numbers = #tpu.dot_dimension_numbers<[1], [0], [0], [1], [0, 0, 1, 1], [], []>} : vector<2x64xbf16>, vector<64x256xbf16>, vector<2x256xf32> -> vector<2x256xf32>
    %353 = arith.addf %349, %352 : vector<2x256xf32>
    %354 = vector.extract_strided_slice %353 {offsets = [0, 0], sizes = [2, 192], strides = [1, 1]} : vector<2x256xf32> to vector<2x192xf32>
    %355 = arith.negf %354 : vector<2x192xf32>
    %356 = math.exp %355 : vector<2x192xf32>
    %cst_108 = arith.constant 1.000000e+00 : f32
    %357 = vector.broadcast %cst_108 : f32 to vector<2x192xf32>
    %358 = arith.addf %357, %356 : vector<2x192xf32>
    %359 = arith.divf %357, %358 : vector<2x192xf32>
    %360 = vector.extract_strided_slice %353 {offsets = [0, 192], sizes = [2, 64], strides = [1, 1]} : vector<2x256xf32> to vector<2x64xf32>
    %361 = math.tanh %360 : vector<2x64xf32>
    %362 = vector.extract_strided_slice %359 {offsets = [0, 64], sizes = [2, 64], strides = [1, 1]} : vector<2x192xf32> to vector<2x64xf32>
    %363 = arith.mulf %362, %345 : vector<2x64xf32>
    %364 = vector.extract_strided_slice %359 {offsets = [0, 0], sizes = [2, 64], strides = [1, 1]} : vector<2x192xf32> to vector<2x64xf32>
    %365 = arith.mulf %364, %361 : vector<2x64xf32>
    %366 = arith.addf %363, %365 : vector<2x64xf32>
    %367 = vector.extract_strided_slice %359 {offsets = [0, 128], sizes = [2, 64], strides = [1, 1]} : vector<2x192xf32> to vector<2x64xf32>
    %368 = math.tanh %366 : vector<2x64xf32>
    %369 = arith.mulf %367, %368 : vector<2x64xf32>
    %370 = arith.truncf %17 : vector<2x64xf32> to vector<2x64xbf16>
    %c32_109 = arith.constant 32 : index
    %c0_110 = arith.constant 0 : index
    %371 = vector.load %arg3[%c32_109, %c0_110] : memref<160x64xbf16, #tpu.memory_space<vmem>>, vector<64x64xbf16>
    %cst_111 = arith.constant dense<0.000000e+00> : vector<2x64xf32>
    %372 = tpu.matmul %370, %371, %cst_111 {dimension_numbers = #tpu.dot_dimension_numbers<[1], [0], [0], [1], [0, 0, 1, 1], [], []>} : vector<2x64xbf16>, vector<64x64xbf16>, vector<2x64xf32> -> vector<2x64xf32>
    %373 = arith.truncf %369 : vector<2x64xf32> to vector<2x64xbf16>
    %c96 = arith.constant 96 : index
    %c0_112 = arith.constant 0 : index
    %374 = vector.load %arg3[%c96, %c0_112] : memref<160x64xbf16, #tpu.memory_space<vmem>>, vector<64x64xbf16>
    %cst_113 = arith.constant dense<0.000000e+00> : vector<2x64xf32>
    %375 = tpu.matmul %373, %374, %cst_113 {dimension_numbers = #tpu.dot_dimension_numbers<[1], [0], [0], [1], [0, 0, 1, 1], [], []>} : vector<2x64xbf16>, vector<64x64xbf16>, vector<2x64xf32> -> vector<2x64xf32>
    %376 = arith.addf %372, %375 : vector<2x64xf32>
    %377 = vector.broadcast %3 : vector<1x64xf32> to vector<2x64xf32>
    %378 = arith.addf %376, %377 : vector<2x64xf32>
    %cst_114 = arith.constant 0.000000e+00 : f32
    %379 = vector.broadcast %cst_114 : f32 to vector<2x64xf32>
    %380 = arith.maximumf %378, %379 : vector<2x64xf32>
    %381 = arith.truncf %380 : vector<2x64xf32> to vector<2x64xbf16>
    %c96_115 = arith.constant 96 : index
    %c0_116 = arith.constant 0 : index
    %382 = vector.load %arg2[%c96_115, %c0_116] : memref<160x256xbf16, #tpu.memory_space<vmem>>, vector<64x256xbf16>
    %cst_117 = arith.constant dense<0.000000e+00> : vector<2x256xf32>
    %383 = tpu.matmul %381, %382, %cst_117 {dimension_numbers = #tpu.dot_dimension_numbers<[1], [0], [0], [1], [0, 0, 1, 1], [], []>} : vector<2x64xbf16>, vector<64x256xbf16>, vector<2x256xf32> -> vector<2x256xf32>
    %384 = vector.broadcast %1 : vector<1x256xf32> to vector<2x256xf32>
    %385 = arith.addf %383, %384 : vector<2x256xf32>
    %386 = vector.extract_strided_slice %385 {offsets = [0, 0], sizes = [2, 128], strides = [1, 1]} : vector<2x256xf32> to vector<2x128xf32>
    %387 = vector.extract_strided_slice %385 {offsets = [0, 128], sizes = [2, 128], strides = [1, 1]} : vector<2x256xf32> to vector<2x128xf32>
    %388 = arith.mulf %386, %387 : vector<2x128xf32>
    %389 = arith.truncf %388 : vector<2x128xf32> to vector<2x128xbf16>
    %c16_118 = arith.constant 16 : index
    %c0_119 = arith.constant 0 : index
    %390 = vector.load %arg4[%c16_118, %c0_119] : memref<144x32xbf16, #tpu.memory_space<vmem>>, vector<128x32xbf16>
    %cst_120 = arith.constant dense<0.000000e+00> : vector<2x32xf32>
    %391 = tpu.matmul %389, %390, %cst_120 {dimension_numbers = #tpu.dot_dimension_numbers<[1], [0], [0], [1], [0, 0, 1, 1], [], []>} : vector<2x128xbf16>, vector<128x32xbf16>, vector<2x32xf32> -> vector<2x32xf32>
    %392 = vector.extract_strided_slice %391 {offsets = [0, 0], sizes = [2, 8], strides = [1, 1]} : vector<2x32xf32> to vector<2x8xf32>
    %393 = vector.broadcast %5 : vector<1x8xf32> to vector<2x8xf32>
    %394 = arith.addf %392, %393 : vector<2x8xf32>
    %c0_121 = arith.constant 0 : index
    %c0_122 = arith.constant 0 : index
    %395 = vector.load %arg6[%c0_121, %c0_122] : memref<2x8xf32, #tpu.memory_space<vmem>>, vector<2x8xf32>
    tpu.vector_store %arg6[%c0_121, %c0_122], %394 {strides = array<i32>} : memref<2x8xf32, #tpu.memory_space<vmem>>, vector<2x8xf32>,
    return
  }
}

</mosaic_0001>

<llo_original>
// kernel: net_forward.1
$region0: #{net_forward.1}
  #allocation0 [shape = 'u32[]', space=smem, size = 0x4, offset = 0x4, fixed_abs, tag = 'smem constant byte address 0x4 - core index']
  #allocation1 [shape = 'u32[144,128]{1,0:T(1,128)}', space=vmem, size = 0x12000, scoped, tag = 'internal scratch']
  #allocation2 [shape = 'f32[32,256]{1,0:T(8,128)}', space=vmem, size = 0x8000, scoped, tag = 'scratch operand']
  %s0 = inlined_call_operand.vmem [shape: f32[24,32], index: 0, kind: input, shape index: {}]
  %s1 = inlined_call_operand.vmem [shape: f32[32,12], index: 1, kind: input, shape index: {}]
  %s2 = inlined_call_operand.vmem [shape: bf16[160,256], index: 2, kind: input, shape index: {}]
  %s3 = inlined_call_operand.vmem [shape: bf16[160,64], index: 3, kind: input, shape index: {}]
  %s4 = inlined_call_operand.vmem [shape: bf16[144,32], index: 4, kind: input, shape index: {}]
  %s5 = inlined_call_operand.vmem [shape: f32[8,256], index: 5, kind: input, shape index: {}]
  %s6 = inlined_call_operand.hbm [shape: f32[2,8], index: 6, kind: output, shape index: {}]
  %s7 = sld [smem:[#allocation0]]
  $region34: #{net_forward.1} parent=0
    _
  %s9 = ssub.s32 1, %s7
  %s10 = scalar_select 0, %s9, %s7
  $region1: #{net_forward.1} parent=0
    #allocation3 [shape = 'u8[1024]{0}', space=vmem, size = 0x400, scoped, tag = 'output window, operand 0, single buffered']
    #allocation4 [shape = 's32[1]{0}', space=sflag, size = 0x4, scoped, tag = 'scoped memory for net_forward.1']
    %11 = vsyncpa [#allocation4], 0
    // Predicated region
    $region2: #{net_forward.1} parent=1 // pred_check
      _
    $region3: #{net_forward.1} parent=1 // pred_check_branch
      %13 = sbr.rel (0) target = $region5
    $region4: #{net_forward.1} parent=1 // pred_region
      _
    $region5: #{net_forward.1} parent=1 // pred_fallthru
      _
    // Predicated region
    $region6: #{net_forward.1} parent=1 // pred_check
      _
    $region7: #{net_forward.1} parent=1 // pred_check_branch
      %15 = sbr.rel (0) target = $region9
    $region8: #{net_forward.1} parent=1 // pred_region
      _
    $region9: #{net_forward.1} parent=1 // pred_fallthru
      _
    // Predicated region
    $region10: #{net_forward.1} parent=1 // pred_check
      _
    $region11: #{net_forward.1} parent=1 // pred_check_branch
      %17 = sbr.rel (0) target = $region13
    $region12: #{net_forward.1} parent=1 // pred_region
      _
    $region13: #{net_forward.1} parent=1 // pred_fallthru
      _
    // Predicated region
    $region14: #{net_forward.1} parent=1 // pred_check
      _
    $region15: #{net_forward.1} parent=1 // pred_check_branch
      %19 = sbr.rel (0) target = $region17
    $region16: #{net_forward.1} parent=1 // pred_region
      _
    $region17: #{net_forward.1} parent=1 // pred_fallthru
      _
    // Predicated region
    $region18: #{net_forward.1} parent=1 // pred_check
      _
    $region19: #{net_forward.1} parent=1 // pred_check_branch
      %21 = sbr.rel (0) target = $region21
    $region20: #{net_forward.1} parent=1 // pred_region
      _
    $region21: #{net_forward.1} parent=1 // pred_fallthru
      _
    // Predicated region
    $region22: #{net_forward.1} parent=1 // pred_check
      _
    $region23: #{net_forward.1} parent=1 // pred_check_branch
      %23 = sbr.rel (0) target = $region25
    $region24: #{net_forward.1} parent=1 // pred_region
      _
    $region25: #{net_forward.1} parent=1 // pred_fallthru
      _
    %v25 = vld [vmem:[%s5] ss:$8 sm:$0x3]
    %s26 = scalar_lea.vmem %s5, 1
    %v27 = vld [vmem:[%s26] ss:$8 sm:$0x3]
    %v28 = vld [vmem:[%s5 + $0x2] ss:$0 sm:$0xff]
    %v29 = vld [vmem:[%s5 + $0x3] ss:$0 sm:$0xff]
    %v30 = vld [vmem:[%s5 + $0x4] ss:$0 sm:$0xff]
    %v31 = vld [vmem:[%s5 + $0x5] ss:$0 sm:$0xff]
    %v32 = vld [vmem:[%s5] sm:$0xc0]
    %v33 = vpack.c.bf16 %v32, %v32
    %v34 = vld [vmem:[%s0] sm:$0xff]
    %v35 = vld [vmem:[%s0 + $0x8] sm:$0xff]
    %v36 = vld [vmem:[%s0 + $0x10] sm:$0xff]
    %v37 = vpack.c.bf16 %v35, %v34
    %v38 = vpack.c.bf16 %v36, %v36
    %v39 = vld [vmem:[%s3] sm:$0xf]
    %v40 = vld [vmem:[%s3 + $0x4] sm:$0xf]
    %v41 = vld [vmem:[%s3 + $0x8] sm:$0xf]
    %v42 = vld [vmem:[%s3 + $0xc] sm:$0xf]
    %v47 = vunpack.c.l.b16 %v39
    %v48 = vunpack.c.l.b16 %v40
    %v49 = vunpack.c.l.b16 %v41
    %v50 = vunpack.c.l.b16 %v42
    %v51 = vpack.c.b16 %v48, %v47
    %v52 = vpack.c.b16 %v50, %v49
    %vm55 = vcmask 261120
    %v57 = vsel %vm55, %v37, 0
    %v60 = vsel %vm55, %v38, 0
    %62 = vmatprep.subr.bf16.mxu0 0
    %63 = vmatpush1.bf16.msra.mxu0 0
    %64 = vmatprep.subr.bf16.mxu0 0
    %65 = vmatpush1.bf16.msra.mxu0 0
    %66 = vmatprep.subr.bf16.mxu0 0
    %67 = vmatpush1.bf16.msra.mxu0 0
    %68 = vmatprep.subr.bf16.mxu0 0
    %69 = vmatpush1.bf16.msra.mxu0 0
    %70 = vmatprep.subr.bf16.mxu0 0
    %71 = vmatpush1.bf16.msra.mxu0 0
    %72 = vmatprep.subr.bf16.mxu0 0
    %73 = vmatpush1.bf16.msra.mxu0 0
    %74 = vmatprep.subr.bf16.mxu0 0
    %75 = vmatpush1.bf16.msra.mxu0 %v52
    %76 = vmatprep.subr.bf16.mxu0 0
    %77 = vmatpush1.bf16.msra.mxu0 %v51
    %78 = vmatprep.subr.bf16.mxu0 0
    %79 = vmatpush2.bf16.msra.mxu0 0
    %80 = vmatprep.subr.bf16.mxu0 0
    %81 = vmatpush2.bf16.msra.mxu0 0
    %82 = vmatprep.subr.bf16.mxu0 0
    %83 = vmatpush2.bf16.msra.mxu0 0
    %84 = vmatprep.subr.bf16.mxu0 0
    %85 = vmatpush2.bf16.msra.mxu0 0
    %86 = vmatprep.subr.bf16.mxu0 0
    %87 = vmatpush2.bf16.msra.mxu0 0
    %88 = vmatprep.subr.bf16.mxu0 0
    %89 = vmatpush2.bf16.msra.mxu0 0
    %90 = vmatprep.subr.bf16.mxu0 0
    %91 = vmatpush2.bf16.msra.mxu0 0
    %92 = vmatprep.subr.bf16.mxu0 0
    %93 = vmatpush2.bf16.msra.mxu0 0
    %94 = vmatprep.mubr.bf16.mxu0 0
    %95 = vmatmul.mubr.bf16.gmra.mxu0 %v57
    %v96 = vpop.f32.mrf.mxu0
    %v97 = vadd.f32 %v28, %v96
    %v98 = vpop.f32.mrf.mxu0
    %v99 = vpop.f32.mrf.mxu0
    %v100 = vadd.f32 %v28, %v99
    %v101 = vpop.f32.mrf.mxu0
    %102 = vmatprep.mubr.bf16.mxu0 0
    %103 = vmatmul.mubr.bf16.gmra.mxu0 %v60
    %v104 = vpop.f32.mrf.mxu0
    %v105 = vadd.f32 %v28, %v104
    %v106 = vpop.f32.mrf.mxu0
    %v107 = vpop.f32.mrf.mxu0
    %v108 = vpop.f32.mrf.mxu0
    %109 = vdwg.mxu0
    %v110 = vmax.f32 %v97, 0.0
    %v111 = vmax.f32 %v100, 0.0
    %v112 = vmax.f32 %v105, 0.0
    %v113 = vpack.c.bf16 %v111, %v110
    %v114 = vpack.c.bf16 %v112, %v112
    %v116 = vrot.slane %v33, 3
    %vm117 = vcmask 195584
    %v119 = vsel %vm117, %v116, 0
    %vm121 = vcmask 1043456
    %v123 = vsel %vm121, %v114, 0
    %125 = vmatprep.subr.bf16.mxu0 0
    %126 = vmatpush1.bf16.msra.mxu0 0
    %127 = vmatprep.subr.bf16.mxu0 0
    %128 = vmatpush1.bf16.msra.mxu0 0
    %129 = vmatprep.subr.bf16.mxu0 0
    %130 = vmatpush1.bf16.msra.mxu0 0
    %131 = vmatprep.subr.bf16.mxu0 0
    %132 = vmatpush1.bf16.msra.mxu0 0
    %133 = vmatprep.subr.bf16.mxu0 0
    %134 = vmatpush1.bf16.msra.mxu0 0
    %135 = vmatprep.subr.bf16.mxu0 0
    %136 = vmatpush1.bf16.msra.mxu0 0
    %137 = vmatprep.subr.bf16.mxu0 0
    %138 = vmatpush1.bf16.msra.mxu0 %v123
    %139 = vmatprep.subr.bf16.mxu0 0
    %140 = vmatpush1.bf16.msra.mxu0 %v113
    %141 = vmatprep.subr.bf16.mxu0 0
    %142 = vmatpush2.bf16.msra.mxu0 0
    %143 = vmatprep.subr.bf16.mxu0 0
    %144 = vmatpush2.bf16.msra.mxu0 0
    %145 = vmatprep.subr.bf16.mxu0 0
    %146 = vmatpush2.bf16.msra.mxu0 0
    %147 = vmatprep.subr.bf16.mxu0 0
    %148 = vmatpush2.bf16.msra.mxu0 0
    %149 = vmatprep.subr.bf16.mxu0 0
    %150 = vmatpush2.bf16.msra.mxu0 0
    %151 = vmatprep.subr.bf16.mxu0 0
    %152 = vmatpush2.bf16.msra.mxu0 0
    %153 = vmatprep.subr.bf16.mxu0 0
    %154 = vmatpush2.bf16.msra.mxu0 0
    %155 = vmatprep.subr.bf16.mxu0 0
    %156 = vmatpush2.bf16.msra.mxu0 0
    %157 = vmatprep.mubr.bf16.mxu0 0
    %158 = vmatmul.mubr.bf16.gmra.mxu0 %v119
    %v159 = vpop.f32.mrf.mxu0
    %v160 = vadd.f32 0.0, %v159
    %v161 = vpop.f32.mrf.mxu0
    %v162 = vpop.f32.mrf.mxu0
    %v163 = vpop.f32.mrf.mxu0
    %164 = vdwg.mxu0
    %v165 = vld [vmem:[%s1] sm:$0xff]
    %v166 = vld [vmem:[%s1 + $0x8] sm:$0xff]
    %v167 = vld [vmem:[%s1 + $0x10] sm:$0xff]
    %v168 = vld [vmem:[%s1 + $0x18] sm:$0xff]
    %v169 = vpack.c.bf16 %v166, %v165
    %v170 = vpack.c.bf16 %v168, %v167
    %v171 = vld [vmem:[%s4] sm:$0xf]
    %v172 = vld [vmem:[%s4 + $0x4] sm:$0x3]
    %v175 = vunpack.c.l.b16 %v171
    %v176 = vunpack.c.l.b16 %v172
    %v177 = vpack.c.b16 %v176, %v175
    %vm178 = vcmask 97280
    %v180 = vsel %vm178, %v169, 0
    %v183 = vsel %vm178, %v170, 0
    %vm185 = vcmask 1045504
    %v187 = vsel %vm185, %v177, 0
    %189 = vmatprep.subr.bf16.mxu0 0
    %190 = vmatpush1.bf16.msra.mxu0 0
    %191 = vmatprep.subr.bf16.mxu0 0
    %192 = vmatpush1.bf16.msra.mxu0 0
    %193 = vmatprep.subr.bf16.mxu0 0
    %194 = vmatpush1.bf16.msra.mxu0 0
    %195 = vmatprep.subr.bf16.mxu0 0
    %196 = vmatpush1.bf16.msra.mxu0 0
    %197 = vmatprep.subr.bf16.mxu0 0
    %198 = vmatpush1.bf16.msra.mxu0 0
    %199 = vmatprep.subr.bf16.mxu0 0
    %200 = vmatpush1.bf16.msra.mxu0 0
    %201 = vmatprep.subr.bf16.mxu0 0
    %202 = vmatpush1.bf16.msra.mxu0 0
    %203 = vmatprep.subr.bf16.mxu0 0
    %204 = vmatpush1.bf16.msra.mxu0 %v187
    %205 = vmatprep.subr.bf16.mxu0 0
    %206 = vmatpush2.bf16.msra.mxu0 0
    %207 = vmatprep.subr.bf16.mxu0 0
    %208 = vmatpush2.bf16.msra.mxu0 0
    %209 = vmatprep.subr.bf16.mxu0 0
    %210 = vmatpush2.bf16.msra.mxu0 0
    %211 = vmatprep.subr.bf16.mxu0 0
    %212 = vmatpush2.bf16.msra.mxu0 0
    %213 = vmatprep.subr.bf16.mxu0 0
    %214 = vmatpush2.bf16.msra.mxu0 0
    %215 = vmatprep.subr.bf16.mxu0 0
    %216 = vmatpush2.bf16.msra.mxu0 0
    %217 = vmatprep.subr.bf16.mxu0 0
    %218 = vmatpush2.bf16.msra.mxu0 0
    %219 = vmatprep.subr.bf16.mxu0 0
    %220 = vmatpush2.bf16.msra.mxu0 0
    %221 = vmatprep.mubr.bf16.mxu0 0
    %222 = vmatmul.mubr.bf16.gmra.mxu0 %v180
    %v223 = vpop.f32.mrf.mxu0
    %v224 = vadd.f32 %v30, %v223
    %v225 = vpop.f32.mrf.mxu0
    %v226 = vpop.f32.mrf.mxu0
    %v227 = vadd.f32 %v30, %v226
    %v228 = vpop.f32.mrf.mxu0
    %229 = vmatprep.mubr.bf16.mxu0 0
    %230 = vmatmul.mubr.bf16.gmra.mxu0 %v183
    %v231 = vpop.f32.mrf.mxu0
    %v232 = vadd.f32 %v30, %v231
    %v233 = vpop.f32.mrf.mxu0
    %v234 = vpop.f32.mrf.mxu0
    %v235 = vadd.f32 %v30, %v234
    %v236 = vpop.f32.mrf.mxu0
    %237 = vdwg.mxu0
    %v238 = vmax.f32 %v224, 0.0
    %v239 = vmax.f32 %v227, 0.0
    %v240 = vmax.f32 %v232, 0.0
    %v241 = vmax.f32 %v235, 0.0
    %v242 = vpack.c.bf16 %v239, %v238
    %v243 = vpack.c.bf16 %v241, %v240
    %v244 = vld [vmem:[%s2] sm:$0xff]
    %v245 = vld [vmem:[%s2 + $0x8] sm:$0xff]
    %v246 = vld [vmem:[%s2 + $0x10] sm:$0xff]
    %v247 = vld [vmem:[%s2 + $0x18] sm:$0xff]
    %v249 = vlaneseq
    %v250 = vshrl.u32 %v249, 7
    %v251 = vsub.s32 0, %v250
    %v252 = vrot.slane %v25, %v251
    %v253 = vlaneseq
    %v254 = vshrl.u32 %v253, 7
    %v255 = vsub.s32 1, %v254
    %v256 = vrot.slane %v25, %v255
    %v263 = vunpack.c.l.b16 %v244
    %v264 = vunpack.c.h.b16 %v244
    %v265 = vunpack.c.l.b16 %v245
    %v266 = vunpack.c.h.b16 %v245
    %v267 = vunpack.c.l.b16 %v246
    %v268 = vunpack.c.h.b16 %v246
    %v269 = vunpack.c.l.b16 %v247
    %v270 = vunpack.c.h.b16 %v247
    %v271 = vpack.c.b16 %v265, %v263
    %v272 = vpack.c.b16 %v266, %v264
    %v273 = vpack.c.b16 %v269, %v267
    %v274 = vpack.c.b16 %v270, %v268
    %v280 = vsel %vm55, %v242, 0
    %v283 = vsel %vm55, %v243, 0
    %285 = vmatprep.subr.bf16.mxu0 0
    %286 = vmatpush1.bf16.msra.mxu0 0
    %287 = vmatprep.subr.bf16.mxu0 0
    %288 = vmatpush1.bf16.msra.mxu0 0
    %289 = vmatprep.subr.bf16.mxu0 0
    %290 = vmatpush1.bf16.msra.mxu0 0
    %291 = vmatprep.subr.bf16.mxu0 0
    %292 = vmatpush1.bf16.msra.mxu0 0
    %293 = vmatprep.subr.bf16.mxu0 0
    %294 = vmatpush1.bf16.msra.mxu0 0
    %295 = vmatprep.subr.bf16.mxu0 0
    %296 = vmatpush1.bf16.msra.mxu0 0
    %297 = vmatprep.subr.bf16.mxu0 %v274
    %298 = vmatpush1.bf16.msra.mxu0 %v273
    %299 = vmatprep.subr.bf16.mxu0 %v272
    %300 = vmatpush1.bf16.msra.mxu0 %v271
    %301 = vmatprep.subr.bf16.mxu0 0
    %302 = vmatpush2.bf16.msra.mxu0 0
    %303 = vmatprep.subr.bf16.mxu0 0
    %304 = vmatpush2.bf16.msra.mxu0 0
    %305 = vmatprep.subr.bf16.mxu0 0
    %306 = vmatpush2.bf16.msra.mxu0 0
    %307 = vmatprep.subr.bf16.mxu0 0
    %308 = vmatpush2.bf16.msra.mxu0 0
    %309 = vmatprep.subr.bf16.mxu0 0
    %310 = vmatpush2.bf16.msra.mxu0 0
    %311 = vmatprep.subr.bf16.mxu0 0
    %312 = vmatpush2.bf16.msra.mxu0 0
    %313 = vmatprep.subr.bf16.mxu0 0
    %314 = vmatpush2.bf16.msra.mxu0 0
    %315 = vmatprep.subr.bf16.mxu0 0
    %316 = vmatpush2.bf16.msra.mxu0 0
    %317 = vmatprep.mubr.bf16.mxu0 0
    %318 = vmatmul.mubr.bf16.gmra.mxu0 %v280
    %v319 = vpop.f32.mrf.mxu0
    %v320 = vadd.f32 %v252, %v319
    %v321 = vpop.f32.mrf.mxu0
    %v322 = vadd.f32 %v256, %v321
    %v323 = vpop.f32.mrf.mxu0
    %v324 = vadd.f32 %v252, %v323
    %v325 = vpop.f32.mrf.mxu0
    %v326 = vadd.f32 %v256, %v325
    %327 = vmatprep.mubr.bf16.mxu0 0
    %328 = vmatmul.mubr.bf16.gmra.mxu0 %v283
    %v329 = vpop.f32.mrf.mxu0
    %v330 = vadd.f32 %v252, %v329
    %v331 = vpop.f32.mrf.mxu0
    %v332 = vadd.f32 %v256, %v331
    %v333 = vpop.f32.mrf.mxu0
    %v334 = vadd.f32 %v252, %v333
    %v335 = vpop.f32.mrf.mxu0
    %v336 = vadd.f32 %v256, %v335
    %337 = vdwg.mxu0
    %338 = vst [vmem:[#allocation2] sm:$0xff] %v320
    %339 = vst [vmem:[#allocation2 + $0x8] sm:$0xff] %v322
    %340 = vst [vmem:[#allocation2 + $0x10] sm:$0xff] %v324
    %341 = vst [vmem:[#allocation2 + $0x18] sm:$0xff] %v326
    %342 = vst [vmem:[#allocation2 + $0x20] sm:$0xff] %v330
    %343 = vst [vmem:[#allocation2 + $0x28] sm:$0xff] %v332
    %344 = vst [vmem:[#allocation2 + $0x30] sm:$0xff] %v334
    %345 = vst [vmem:[#allocation2 + $0x38] sm:$0xff] %v336
    %v346 = vld [vmem:[#allocation2] sm:$0x3]
    %v347 = vld [vmem:[#allocation2 + $0x8] sm:$0x3]
    %v348 = vld [vmem:[%s2 + $0x20] sm:$0xff]
    %v349 = vld [vmem:[%s2 + $0x28] sm:$0xff]
    %v350 = vld [vmem:[%s2 + $0x30] sm:$0xff]
    %v351 = vld [vmem:[%s2 + $0x38] sm:$0xff]
    %v352 = vld [vmem:[%s2 + $0x40] sm:$0xff]
    %v353 = vld [vmem:[%s2 + $0x48] sm:$0xff]
    %v354 = vld [vmem:[%s2 + $0x50] sm:$0xff]
    %v355 = vld [vmem:[%s2 + $0x58] sm:$0xff]
    %v364 = vunpack.c.l.b16 %v348
    %v365 = vunpack.c.h.b16 %v348
    %v366 = vunpack.c.l.b16 %v349
    %v367 = vunpack.c.h.b16 %v349
    %v368 = vunpack.c.l.b16 %v350
    %v369 = vunpack.c.h.b16 %v350
    %v370 = vunpack.c.l.b16 %v351
    %v371 = vunpack.c.h.b16 %v351
    %v372 = vunpack.c.l.b16 %v352
    %v373 = vunpack.c.h.b16 %v352
    %v374 = vunpack.c.l.b16 %v353
    %v375 = vunpack.c.h.b16 %v353
    %v376 = vunpack.c.l.b16 %v354
    %v377 = vunpack.c.h.b16 %v354
    %v378 = vunpack.c.l.b16 %v355
    %v379 = vunpack.c.h.b16 %v355
    %v380 = vpack.c.b16 %v366, %v364
    %v381 = vpack.c.b16 %v367, %v365
    %v382 = vpack.c.b16 %v370, %v368
    %v383 = vpack.c.b16 %v371, %v369
    %v384 = vpack.c.b16 %v374, %v372
    %v385 = vpack.c.b16 %v375, %v373
    %v386 = vpack.c.b16 %v378, %v376
    %v387 = vpack.c.b16 %v379, %v377
    %vm396 = vcmask 523264
    %v398 = vsel %vm396, 0, 0
    %400 = vmatprep.subr.bf16.mxu0 0
    %401 = vmatpush1.bf16.msra.mxu0 0
    %402 = vmatprep.subr.bf16.mxu0 0
    %403 = vmatpush1.bf16.msra.mxu0 0
    %404 = vmatprep.subr.bf16.mxu0 0
    %405 = vmatpush1.bf16.msra.mxu0 0
    %406 = vmatprep.subr.bf16.mxu0 0
    %407 = vmatpush1.bf16.msra.mxu0 0
    %408 = vmatprep.subr.bf16.mxu0 %v387
    %409 = vmatpush1.bf16.msra.mxu0 %v386
    %410 = vmatprep.subr.bf16.mxu0 %v385
    %411 = vmatpush1.bf16.msra.mxu0 %v384
    %412 = vmatprep.subr.bf16.mxu0 %v383
    %413 = vmatpush1.bf16.msra.mxu0 %v382
    %414 = vmatprep.subr.bf16.mxu0 %v381
    %415 = vmatpush1.bf16.msra.mxu0 %v380
    %416 = vmatprep.subr.bf16.mxu0 0
    %417 = vmatpush2.bf16.msra.mxu0 0
    %418 = vmatprep.subr.bf16.mxu0 0
    %419 = vmatpush2.bf16.msra.mxu0 0
    %420 = vmatprep.subr.bf16.mxu0 0
    %421 = vmatpush2.bf16.msra.mxu0 0
    %422 = vmatprep.subr.bf16.mxu0 0
    %423 = vmatpush2.bf16.msra.mxu0 0
    %424 = vmatprep.subr.bf16.mxu0 0
    %425 = vmatpush2.bf16.msra.mxu0 0
    %426 = vmatprep.subr.bf16.mxu0 0
    %427 = vmatpush2.bf16.msra.mxu0 0
    %428 = vmatprep.subr.bf16.mxu0 0
    %429 = vmatpush2.bf16.msra.mxu0 0
    %430 = vmatprep.subr.bf16.mxu0 0
    %431 = vmatpush2.bf16.msra.mxu0 0
    %432 = vmatprep.mubr.bf16.mxu0 0
    %433 = vmatmul.mubr.bf16.gmra.mxu0 %v398
    %v434 = vpop.f32.mrf.mxu0
    %v435 = vadd.f32 0.0, %v434
    %v436 = vpop.f32.mrf.mxu0
    %v437 = vadd.f32 0.0, %v436
    %v438 = vpop.f32.mrf.mxu0
    %v439 = vpop.f32.mrf.mxu0
    %440 = vdwg.mxu0
    %v441 = vadd.f32 %v346, %v435
    %v442 = vadd.f32 %v347, %v437
    %v443 = vxor.u32 %v441, 2147483648
    %v444 = vxor.u32 %v442, 2147483648
    %v445 = vmul.f32 %v443, 1.442695
    %v446 = vpow.pop %v445
    %v447 = vmul.f32 %v444, 1.442695
    %v448 = vpow.pop %v447
    %v449 = vadd.f32 %v446, 1.0
    %v450 = vadd.f32 %v448, 1.0
    %v451 = vrcp.pop %v449
    %v452 = vmul.f32 1.0, %v451
    %v453 = vrcp.pop %v450
    %v454 = vmul.f32 1.0, %v453
    %v455 = vtanh.pop %v442
    %v456 = vmul.f32 %v452, 0.0
    %458 = vrot.lane.b32.xlu0 %v455, 64
    %v459 = vpop.permute.xlu0 %458
    %v461 = vmul.f32 %v452, %v459
    %463 = vrot.lane.b32.xlu0 %v461, 64
    %v464 = vpop.permute.xlu0 %463
    %v466 = vadd.f32 %v456, %v464
    %v467 = vtanh.pop %v466
    %469 = vrot.lane.b32.xlu0 %v467, 64
    %v470 = vpop.permute.xlu0 %469
    %v472 = vmul.f32 %v454, %v470
    %v473 = vld [vmem:[#allocation2] sm:$0xc]
    %v474 = vld [vmem:[#allocation2 + $0x8] sm:$0xc]
    %v475 = vpack.c.bf16 %v472, %v472
    %v477 = vsel %vm396, %v475, 0
    %479 = vmatprep.subr.bf16.mxu0 0
    %480 = vmatpush1.bf16.msra.mxu0 0
    %481 = vmatprep.subr.bf16.mxu0 0
    %482 = vmatpush1.bf16.msra.mxu0 0
    %483 = vmatprep.subr.bf16.mxu0 0
    %484 = vmatpush1.bf16.msra.mxu0 0
    %485 = vmatprep.subr.bf16.mxu0 0
    %486 = vmatpush1.bf16.msra.mxu0 0
    %487 = vmatprep.subr.bf16.mxu0 %v387
    %488 = vmatpush1.bf16.msra.mxu0 %v386
    %489 = vmatprep.subr.bf16.mxu0 %v385
    %490 = vmatpush1.bf16.msra.mxu0 %v384
    %491 = vmatprep.subr.bf16.mxu0 %v383
    %492 = vmatpush1.bf16.msra.mxu0 %v382
    %493 = vmatprep.subr.bf16.mxu0 %v381
    %494 = vmatpush1.bf16.msra.mxu0 %v380
    %495 = vmatprep.subr.bf16.mxu0 0
    %496 = vmatpush2.bf16.msra.mxu0 0
    %497 = vmatprep.subr.bf16.mxu0 0
    %498 = vmatpush2.bf16.msra.mxu0 0
    %499 = vmatprep.subr.bf16.mxu0 0
    %500 = vmatpush2.bf16.msra.mxu0 0
    %501 = vmatprep.subr.bf16.mxu0 0
    %502 = vmatpush2.bf16.msra.mxu0 0
    %503 = vmatprep.subr.bf16.mxu0 0
    %504 = vmatpush2.bf16.msra.mxu0 0
    %505 = vmatprep.subr.bf16.mxu0 0
    %506 = vmatpush2.bf16.msra.mxu0 0
    %507 = vmatprep.subr.bf16.mxu0 0
    %508 = vmatpush2.bf16.msra.mxu0 0
    %509 = vmatprep.subr.bf16.mxu0 0
    %510 = vmatpush2.bf16.msra.mxu0 0
    %511 = vmatprep.mubr.bf16.mxu0 0
    %512 = vmatmul.mubr.bf16.gmra.mxu0 %v477
    %v513 = vpop.f32.mrf.mxu0
    %v514 = vadd.f32 0.0, %v513
    %v515 = vpop.f32.mrf.mxu0
    %v516 = vadd.f32 0.0, %v515
    %v517 = vpop.f32.mrf.mxu0
    %v518 = vpop.f32.mrf.mxu0
    %519 = vdwg.mxu0
    %v522 = vrot.slane %v514, 6
    %v523 = vrot.slane %v516, 6
    %v526 = vadd.f32 %v473, %v522
    %v527 = vadd.f32 %v474, %v523
    %v528 = vxor.u32 %v526, 2147483648
    %v529 = vxor.u32 %v527, 2147483648
    %v530 = vmul.f32 %v528, 1.442695
    %v531 = vpow.pop %v530
    %v532 = vmul.f32 %v529, 1.442695
    %v533 = vpow.pop %v532
    %v534 = vadd.f32 %v531, 1.0
    %v535 = vadd.f32 %v533, 1.0
    %v536 = vrcp.pop %v534
    %v537 = vmul.f32 1.0, %v536
    %v538 = vrcp.pop %v535
    %v539 = vmul.f32 1.0, %v538
    %v540 = vtanh.pop %v527
    %v542 = vrot.slane %v466, 6
    %v544 = vmul.f32 %v537, %v542
    %546 = vrot.lane.b32.xlu0 %v540, 64
    %v547 = vpop.permute.xlu0 %546
    %v549 = vmul.f32 %v537, %v547
    %551 = vrot.lane.b32.xlu0 %v549, 64
    %v552 = vpop.permute.xlu0 %551
    %v554 = vadd.f32 %v544, %v552
    %v555 = vtanh.pop %v554
    %557 = vrot.lane.b32.xlu0 %v555, 64
    %v558 = vpop.permute.xlu0 %557
    %v560 = vmul.f32 %v539, %v558
    %v561 = vld [vmem:[#allocation2] sm:$0x30]
    %v562 = vld [vmem:[#allocation2 + $0x8] sm:$0x30]
    %v563 = vpack.c.bf16 %v560, %v560
    %v565 = vrot.slane %v563, 1
    %v567 = vsel %vm396, %v565, 0
    %569 = vmatprep.subr.bf16.mxu0 0
    %570 = vmatpush1.bf16.msra.mxu0 0
    %571 = vmatprep.subr.bf16.mxu0 0
    %572 = vmatpush1.bf16.msra.mxu0 0
    %573 = vmatprep.subr.bf16.mxu0 0
    %574 = vmatpush1.bf16.msra.mxu0 0
    %575 = vmatprep.subr.bf16.mxu0 0
    %576 = vmatpush1.bf16.msra.mxu0 0
    %577 = vmatprep.subr.bf16.mxu0 %v387
    %578 = vmatpush1.bf16.msra.mxu0 %v386
    %579 = vmatprep.subr.bf16.mxu0 %v385
    %580 = vmatpush1.bf16.msra.mxu0 %v384
    %581 = vmatprep.subr.bf16.mxu0 %v383
    %582 = vmatpush1.bf16.msra.mxu0 %v382
    %583 = vmatprep.subr.bf16.mxu0 %v381
    %584 = vmatpush1.bf16.msra.mxu0 %v380
    %585 = vmatprep.subr.bf16.mxu0 0
    %586 = vmatpush2.bf16.msra.mxu0 0
    %587 = vmatprep.subr.bf16.mxu0 0
    %588 = vmatpush2.bf16.msra.mxu0 0
    %589 = vmatprep.subr.bf16.mxu0 0
    %590 = vmatpush2.bf16.msra.mxu0 0
    %591 = vmatprep.subr.bf16.mxu0 0
    %592 = vmatpush2.bf16.msra.mxu0 0
    %593 = vmatprep.subr.bf16.mxu0 0
    %594 = vmatpush2.bf16.msra.mxu0 0
    %595 = vmatprep.subr.bf16.mxu0 0
    %596 = vmatpush2.bf16.msra.mxu0 0
    %597 = vmatprep.subr.bf16.mxu0 0
    %598 = vmatpush2.bf16.msra.mxu0 0
    %599 = vmatprep.subr.bf16.mxu0 0
    %600 = vmatpush2.bf16.msra.mxu0 0
    %601 = vmatprep.mubr.bf16.mxu0 0
    %602 = vmatmul.mubr.bf16.gmra.mxu0 %v567
    %v603 = vpop.f32.mrf.mxu0
    %v604 = vadd.f32 0.0, %v603
    %v605 = vpop.f32.mrf.mxu0
    %v606 = vadd.f32 0.0, %v605
    %v607 = vpop.f32.mrf.mxu0
    %v608 = vpop.f32.mrf.mxu0
    %609 = vdwg.mxu0
    %v612 = vrot.slane %v604, 4
    %v613 = vrot.slane %v606, 4
    %v616 = vadd.f32 %v561, %v612
    %v617 = vadd.f32 %v562, %v613
    %v618 = vxor.u32 %v616, 2147483648
    %v619 = vxor.u32 %v617, 2147483648
    %v620 = vmul.f32 %v618, 1.442695
    %v621 = vpow.pop %v620
    %v622 = vmul.f32 %v619, 1.442695
    %v623 = vpow.pop %v622
    %v624 = vadd.f32 %v621, 1.0
    %v625 = vadd.f32 %v623, 1.0
    %v626 = vrcp.pop %v624
    %v627 = vmul.f32 1.0, %v626
    %v628 = vrcp.pop %v625
    %v629 = vmul.f32 1.0, %v628
    %v630 = vtanh.pop %v617
    %v632 = vrot.slane %v554, 6
    %v634 = vmul.f32 %v627, %v632
    %636 = vrot.lane.b32.xlu0 %v630, 64
    %v637 = vpop.permute.xlu0 %636
    %v639 = vmul.f32 %v627, %v637
    %641 = vrot.lane.b32.xlu0 %v639, 64
    %v642 = vpop.permute.xlu0 %641
    %v644 = vadd.f32 %v634, %v642
    %v645 = vtanh.pop %v644
    %647 = vrot.lane.b32.xlu0 %v645, 64
    %v648 = vpop.permute.xlu0 %647
    %v650 = vmul.f32 %v629, %v648
    %v651 = vld [vmem:[#allocation2] sm:$0xc0]
    %v652 = vld [vmem:[#allocation2 + $0x8] sm:$0xc0]
    %v653 = vpack.c.bf16 %v650, %v650
    %v655 = vrot.slane %v653, 2
    %v657 = vsel %vm396, %v655, 0
    %659 = vmatprep.subr.bf16.mxu0 0
    %660 = vmatpush1.bf16.msra.mxu0 0
    %661 = vmatprep.subr.bf16.mxu0 0
    %662 = vmatpush1.bf16.msra.mxu0 0
    %663 = vmatprep.subr.bf16.mxu0 0
    %664 = vmatpush1.bf16.msra.mxu0 0
    %665 = vmatprep.subr.bf16.mxu0 0
    %666 = vmatpush1.bf16.msra.mxu0 0
    %667 = vmatprep.subr.bf16.mxu0 %v387
    %668 = vmatpush1.bf16.msra.mxu0 %v386
    %669 = vmatprep.subr.bf16.mxu0 %v385
    %670 = vmatpush1.bf16.msra.mxu0 %v384
    %671 = vmatprep.subr.bf16.mxu0 %v383
    %672 = vmatpush1.bf16.msra.mxu0 %v382
    %673 = vmatprep.subr.bf16.mxu0 %v381
    %674 = vmatpush1.bf16.msra.mxu0 %v380
    %675 = vmatprep.subr.bf16.mxu0 0
    %676 = vmatpush2.bf16.msra.mxu0 0
    %677 = vmatprep.subr.bf16.mxu0 0
    %678 = vmatpush2.bf16.msra.mxu0 0
    %679 = vmatprep.subr.bf16.mxu0 0
    %680 = vmatpush2.bf16.msra.mxu0 0
    %681 = vmatprep.subr.bf16.mxu0 0
    %682 = vmatpush2.bf16.msra.mxu0 0
    %683 = vmatprep.subr.bf16.mxu0 0
    %684 = vmatpush2.bf16.msra.mxu0 0
    %685 = vmatprep.subr.bf16.mxu0 0
    %686 = vmatpush2.bf16.msra.mxu0 0
    %687 = vmatprep.subr.bf16.mxu0 0
    %688 = vmatpush2.bf16.msra.mxu0 0
    %689 = vmatprep.subr.bf16.mxu0 0
    %690 = vmatpush2.bf16.msra.mxu0 0
    %691 = vmatprep.mubr.bf16.mxu0 0
    %692 = vmatmul.mubr.bf16.gmra.mxu0 %v657
    %v693 = vpop.f32.mrf.mxu0
    %v694 = vadd.f32 0.0, %v693
    %v695 = vpop.f32.mrf.mxu0
    %v696 = vadd.f32 0.0, %v695
    %v697 = vpop.f32.mrf.mxu0
    %v698 = vpop.f32.mrf.mxu0
    %699 = vdwg.mxu0
    %v702 = vrot.slane %v694, 2
    %v703 = vrot.slane %v696, 2
    %v706 = vadd.f32 %v651, %v702
    %v707 = vadd.f32 %v652, %v703
    %v708 = vxor.u32 %v706, 2147483648
    %v709 = vxor.u32 %v707, 2147483648
    %v710 = vmul.f32 %v708, 1.442695
    %v711 = vpow.pop %v710
    %v712 = vmul.f32 %v709, 1.442695
    %v713 = vpow.pop %v712
    %v714 = vadd.f32 %v711, 1.0
    %v715 = vadd.f32 %v713, 1.0
    %v716 = vrcp.pop %v714
    %v717 = vmul.f32 1.0, %v716
    %v718 = vrcp.pop %v715
    %v719 = vmul.f32 1.0, %v718
    %v720 = vtanh.pop %v707
    %v722 = vrot.slane %v644, 6
    %v724 = vmul.f32 %v717, %v722
    %726 = vrot.lane.b32.xlu0 %v720, 64
    %v727 = vpop.permute.xlu0 %726
    %v729 = vmul.f32 %v717, %v727
    %731 = vrot.lane.b32.xlu0 %v729, 64
    %v732 = vpop.permute.xlu0 %731
    %v734 = vadd.f32 %v724, %v732
    %v735 = vtanh.pop %v734
    %737 = vrot.lane.b32.xlu0 %v735, 64
    %v738 = vpop.permute.xlu0 %737
    %v740 = vmul.f32 %v719, %v738
    %v741 = vld [vmem:[#allocation2 + $0x10] sm:$0x3]
    %v742 = vld [vmem:[#allocation2 + $0x18] sm:$0x3]
    %v743 = vpack.c.bf16 %v740, %v740
    %v745 = vrot.slane %v743, 3
    %v747 = vsel %vm396, %v745, 0
    %749 = vmatprep.subr.bf16.mxu0 0
    %750 = vmatpush1.bf16.msra.mxu0 0
    %751 = vmatprep.subr.bf16.mxu0 0
    %752 = vmatpush1.bf16.msra.mxu0 0
    %753 = vmatprep.subr.bf16.mxu0 0
    %754 = vmatpush1.bf16.msra.mxu0 0
    %755 = vmatprep.subr.bf16.mxu0 0
    %756 = vmatpush1.bf16.msra.mxu0 0
    %757 = vmatprep.subr.bf16.mxu0 %v387
    %758 = vmatpush1.bf16.msra.mxu0 %v386
    %759 = vmatprep.subr.bf16.mxu0 %v385
    %760 = vmatpush1.bf16.msra.mxu0 %v384
    %761 = vmatprep.subr.bf16.mxu0 %v383
    %762 = vmatpush1.bf16.msra.mxu0 %v382
    %763 = vmatprep.subr.bf16.mxu0 %v381
    %764 = vmatpush1.bf16.msra.mxu0 %v380
    %765 = vmatprep.subr.bf16.mxu0 0
    %766 = vmatpush2.bf16.msra.mxu0 0
    %767 = vmatprep.subr.bf16.mxu0 0
    %768 = vmatpush2.bf16.msra.mxu0 0
    %769 = vmatprep.subr.bf16.mxu0 0
    %770 = vmatpush2.bf16.msra.mxu0 0
    %771 = vmatprep.subr.bf16.mxu0 0
    %772 = vmatpush2.bf16.msra.mxu0 0
    %773 = vmatprep.subr.bf16.mxu0 0
    %774 = vmatpush2.bf16.msra.mxu0 0
    %775 = vmatprep.subr.bf16.mxu0 0
    %776 = vmatpush2.bf16.msra.mxu0 0
    %777 = vmatprep.subr.bf16.mxu0 0
    %778 = vmatpush2.bf16.msra.mxu0 0
    %779 = vmatprep.subr.bf16.mxu0 0
    %780 = vmatpush2.bf16.msra.mxu0 0
    %781 = vmatprep.mubr.bf16.mxu0 0
    %782 = vmatmul.mubr.bf16.gmra.mxu0 %v747
    %v783 = vpop.f32.mrf.mxu0
    %v784 = vadd.f32 0.0, %v783
    %v785 = vpop.f32.mrf.mxu0
    %v786 = vadd.f32 0.0, %v785
    %v787 = vpop.f32.mrf.mxu0
    %v788 = vpop.f32.mrf.mxu0
    %789 = vdwg.mxu0
    %v790 = vadd.f32 %v741, %v784
    %v791 = vadd.f32 %v742, %v786
    %v792 = vxor.u32 %v790, 2147483648
    %v793 = vxor.u32 %v791, 2147483648
    %v794 = vmul.f32 %v792, 1.442695
    %v795 = vpow.pop %v794
    %v796 = vmul.f32 %v793, 1.442695
    %v797 = vpow.pop %v796
    %v798 = vadd.f32 %v795, 1.0
    %v799 = vadd.f32 %v797, 1.0
    %v800 = vrcp.pop %v798
    %v801 = vmul.f32 1.0, %v800
    %v802 = vrcp.pop %v799
    %v803 = vmul.f32 1.0, %v802
    %v804 = vtanh.pop %v791
    %v806 = vrot.slane %v734, 6
    %v808 = vmul.f32 %v801, %v806
    %810 = vrot.lane.b32.xlu0 %v804, 64
    %v811 = vpop.permute.xlu0 %810
    %v813 = vmul.f32 %v801, %v811
    %815 = vrot.lane.b32.xlu0 %v813, 64
    %v816 = vpop.permute.xlu0 %815
    %v818 = vadd.f32 %v808, %v816
    %v819 = vtanh.pop %v818
    %821 = vrot.lane.b32.xlu0 %v819, 64
    %v822 = vpop.permute.xlu0 %821
    %v824 = vmul.f32 %v803, %v822
    %v825 = vld [vmem:[#allocation2 + $0x10] sm:$0xc]
    %v826 = vld [vmem:[#allocation2 + $0x18] sm:$0xc]
    %v827 = vpack.c.bf16 %v824, %v824
    %v829 = vsel %vm396, %v827, 0
    %831 = vmatprep.subr.bf16.mxu0 0
    %832 = vmatpush1.bf16.msra.mxu0 0
    %833 = vmatprep.subr.bf16.mxu0 0
    %834 = vmatpush1.bf16.msra.mxu0 0
    %835 = vmatprep.subr.bf16.mxu0 0
    %836 = vmatpush1.bf16.msra.mxu0 0
    %837 = vmatprep.subr.bf16.mxu0 0
    %838 = vmatpush1.bf16.msra.mxu0 0
    %839 = vmatprep.subr.bf16.mxu0 %v387
    %840 = vmatpush1.bf16.msra.mxu0 %v386
    %841 = vmatprep.subr.bf16.mxu0 %v385
    %842 = vmatpush1.bf16.msra.mxu0 %v384
    %843 = vmatprep.subr.bf16.mxu0 %v383
    %844 = vmatpush1.bf16.msra.mxu0 %v382
    %845 = vmatprep.subr.bf16.mxu0 %v381
    %846 = vmatpush1.bf16.msra.mxu0 %v380
    %847 = vmatprep.subr.bf16.mxu0 0
    %848 = vmatpush2.bf16.msra.mxu0 0
    %849 = vmatprep.subr.bf16.mxu0 0
    %850 = vmatpush2.bf16.msra.mxu0 0
    %851 = vmatprep.subr.bf16.mxu0 0
    %852 = vmatpush2.bf16.msra.mxu0 0
    %853 = vmatprep.subr.bf16.mxu0 0
    %854 = vmatpush2.bf16.msra.mxu0 0
    %855 = vmatprep.subr.bf16.mxu0 0
    %856 = vmatpush2.bf16.msra.mxu0 0
    %857 = vmatprep.subr.bf16.mxu0 0
    %858 = vmatpush2.bf16.msra.mxu0 0
    %859 = vmatprep.subr.bf16.mxu0 0
    %860 = vmatpush2.bf16.msra.mxu0 0
    %861 = vmatprep.subr.bf16.mxu0 0
    %862 = vmatpush2.bf16.msra.mxu0 0
    %863 = vmatprep.mubr.bf16.mxu0 0
    %864 = vmatmul.mubr.bf16.gmra.mxu0 %v829
    %v865 = vpop.f32.mrf.mxu0
    %v866 = vadd.f32 0.0, %v865
    %v867 = vpop.f32.mrf.mxu0
    %v868 = vadd.f32 0.0, %v867
    %v869 = vpop.f32.mrf.mxu0
    %v870 = vpop.f32.mrf.mxu0
    %871 = vdwg.mxu0
    %v874 = vrot.slane %v866, 6
    %v875 = vrot.slane %v868, 6
    %v878 = vadd.f32 %v825, %v874
    %v879 = vadd.f32 %v826, %v875
    %v880 = vxor.u32 %v878, 2147483648
    %v881 = vxor.u32 %v879, 2147483648
    %v882 = vmul.f32 %v880, 1.442695
    %v883 = vpow.pop %v882
    %v884 = vmul.f32 %v881, 1.442695
    %v885 = vpow.pop %v884
    %v886 = vadd.f32 %v883, 1.0
    %v887 = vadd.f32 %v885, 1.0
    %v888 = vrcp.pop %v886
    %v889 = vmul.f32 1.0, %v888
    %v890 = vrcp.pop %v887
    %v891 = vmul.f32 1.0, %v890
    %v892 = vtanh.pop %v879
    %v894 = vrot.slane %v818, 6
    %v896 = vmul.f32 %v889, %v894
    %898 = vrot.lane.b32.xlu0 %v892, 64
    %v899 = vpop.permute.xlu0 %898
    %v901 = vmul.f32 %v889, %v899
    %903 = vrot.lane.b32.xlu0 %v901, 64
    %v904 = vpop.permute.xlu0 %903
    %v906 = vadd.f32 %v896, %v904
    %v907 = vtanh.pop %v906
    %909 = vrot.lane.b32.xlu0 %v907, 64
    %v910 = vpop.permute.xlu0 %909
    %v912 = vmul.f32 %v891, %v910
    %v913 = vld [vmem:[#allocation2 + $0x10] sm:$0x30]
    %v914 = vld [vmem:[#allocation2 + $0x18] sm:$0x30]
    %v915 = vpack.c.bf16 %v912, %v912
    %v917 = vrot.slane %v915, 1
    %v919 = vsel %vm396, %v917, 0
    %921 = vmatprep.subr.bf16.mxu0 0
    %922 = vmatpush1.bf16.msra.mxu0 0
    %923 = vmatprep.subr.bf16.mxu0 0
    %924 = vmatpush1.bf16.msra.mxu0 0
    %925 = vmatprep.subr.bf16.mxu0 0
    %926 = vmatpush1.bf16.msra.mxu0 0
    %927 = vmatprep.subr.bf16.mxu0 0
    %928 = vmatpush1.bf16.msra.mxu0 0
    %929 = vmatprep.subr.bf16.mxu0 %v387
    %930 = vmatpush1.bf16.msra.mxu0 %v386
    %931 = vmatprep.subr.bf16.mxu0 %v385
    %932 = vmatpush1.bf16.msra.mxu0 %v384
    %933 = vmatprep.subr.bf16.mxu0 %v383
    %934 = vmatpush1.bf16.msra.mxu0 %v382
    %935 = vmatprep.subr.bf16.mxu0 %v381
    %936 = vmatpush1.bf16.msra.mxu0 %v380
    %937 = vmatprep.subr.bf16.mxu0 0
    %938 = vmatpush2.bf16.msra.mxu0 0
    %939 = vmatprep.subr.bf16.mxu0 0
    %940 = vmatpush2.bf16.msra.mxu0 0
    %941 = vmatprep.subr.bf16.mxu0 0
    %942 = vmatpush2.bf16.msra.mxu0 0
    %943 = vmatprep.subr.bf16.mxu0 0
    %944 = vmatpush2.bf16.msra.mxu0 0
    %945 = vmatprep.subr.bf16.mxu0 0
    %946 = vmatpush2.bf16.msra.mxu0 0
    %947 = vmatprep.subr.bf16.mxu0 0
    %948 = vmatpush2.bf16.msra.mxu0 0
    %949 = vmatprep.subr.bf16.mxu0 0
    %950 = vmatpush2.bf16.msra.mxu0 0
    %951 = vmatprep.subr.bf16.mxu0 0
    %952 = vmatpush2.bf16.msra.mxu0 0
    %953 = vmatprep.mubr.bf16.mxu0 0
    %954 = vmatmul.mubr.bf16.gmra.mxu0 %v919
    %v955 = vpop.f32.mrf.mxu0
    %v956 = vadd.f32 0.0, %v955
    %v957 = vpop.f32.mrf.mxu0
    %v958 = vadd.f32 0.0, %v957
    %v959 = vpop.f32.mrf.mxu0
    %v960 = vpop.f32.mrf.mxu0
    %961 = vdwg.mxu0
    %v964 = vrot.slane %v956, 4
    %v965 = vrot.slane %v958, 4
    %v968 = vadd.f32 %v913, %v964
    %v969 = vadd.f32 %v914, %v965
    %v970 = vxor.u32 %v968, 2147483648
    %v971 = vxor.u32 %v969, 2147483648
    %v972 = vmul.f32 %v970, 1.442695
    %v973 = vpow.pop %v972
    %v974 = vmul.f32 %v971, 1.442695
    %v975 = vpow.pop %v974
    %v976 = vadd.f32 %v973, 1.0
    %v977 = vadd.f32 %v975, 1.0
    %v978 = vrcp.pop %v976
    %v979 = vmul.f32 1.0, %v978
    %v980 = vrcp.pop %v977
    %v981 = vmul.f32 1.0, %v980
    %v982 = vtanh.pop %v969
    %v984 = vrot.slane %v906, 6
    %v986 = vmul.f32 %v979, %v984
    %988 = vrot.lane.b32.xlu0 %v982, 64
    %v989 = vpop.permute.xlu0 %988
    %v991 = vmul.f32 %v979, %v989
    %993 = vrot.lane.b32.xlu0 %v991, 64
    %v994 = vpop.permute.xlu0 %993
    %v996 = vadd.f32 %v986, %v994
    %v997 = vtanh.pop %v996
    %999 = vrot.lane.b32.xlu0 %v997, 64
    %v1000 = vpop.permute.xlu0 %999
    %v1002 = vmul.f32 %v981, %v1000
    %v1003 = vld [vmem:[#allocation2 + $0x10] sm:$0xc0]
    %v1004 = vld [vmem:[#allocation2 + $0x18] sm:$0xc0]
    %v1005 = vpack.c.bf16 %v1002, %v1002
    %v1007 = vrot.slane %v1005, 2
    %v1009 = vsel %vm396, %v1007, 0
    %1011 = vmatprep.subr.bf16.mxu0 0
    %1012 = vmatpush1.bf16.msra.mxu0 0
    %1013 = vmatprep.subr.bf16.mxu0 0
    %1014 = vmatpush1.bf16.msra.mxu0 0
    %1015 = vmatprep.subr.bf16.mxu0 0
    %1016 = vmatpush1.bf16.msra.mxu0 0
    %1017 = vmatprep.subr.bf16.mxu0 0
    %1018 = vmatpush1.bf16.msra.mxu0 0
    %1019 = vmatprep.subr.bf16.mxu0 %v387
    %1020 = vmatpush1.bf16.msra.mxu0 %v386
    %1021 = vmatprep.subr.bf16.mxu0 %v385
    %1022 = vmatpush1.bf16.msra.mxu0 %v384
    %1023 = vmatprep.subr.bf16.mxu0 %v383
    %1024 = vmatpush1.bf16.msra.mxu0 %v382
    %1025 = vmatprep.subr.bf16.mxu0 %v381
    %1026 = vmatpush1.bf16.msra.mxu0 %v380
    %1027 = vmatprep.subr.bf16.mxu0 0
    %1028 = vmatpush2.bf16.msra.mxu0 0
    %1029 = vmatprep.subr.bf16.mxu0 0
    %1030 = vmatpush2.bf16.msra.mxu0 0
    %1031 = vmatprep.subr.bf16.mxu0 0
    %1032 = vmatpush2.bf16.msra.mxu0 0
    %1033 = vmatprep.subr.bf16.mxu0 0
    %1034 = vmatpush2.bf16.msra.mxu0 0
    %1035 = vmatprep.subr.bf16.mxu0 0
    %1036 = vmatpush2.bf16.msra.mxu0 0
    %1037 = vmatprep.subr.bf16.mxu0 0
    %1038 = vmatpush2.bf16.msra.mxu0 0
    %1039 = vmatprep.subr.bf16.mxu0 0
    %1040 = vmatpush2.bf16.msra.mxu0 0
    %1041 = vmatprep.subr.bf16.mxu0 0
    %1042 = vmatpush2.bf16.msra.mxu0 0
    %1043 = vmatprep.mubr.bf16.mxu0 0
    %1044 = vmatmul.mubr.bf16.gmra.mxu0 %v1009
    %v1045 = vpop.f32.mrf.mxu0
    %v1046 = vadd.f32 0.0, %v1045
    %v1047 = vpop.f32.mrf.mxu0
    %v1048 = vadd.f32 0.0, %v1047
    %v1049 = vpop.f32.mrf.mxu0
    %v1050 = vpop.f32.mrf.mxu0
    %1051 = vdwg.mxu0
    %v1054 = vrot.slane %v1046, 2
    %v1055 = vrot.slane %v1048, 2
    %v1058 = vadd.f32 %v1003, %v1054
    %v1059 = vadd.f32 %v1004, %v1055
    %v1060 = vxor.u32 %v1058, 2147483648
    %v1061 = vxor.u32 %v1059, 2147483648
    %v1062 = vmul.f32 %v1060, 1.442695
    %v1063 = vpow.pop %v1062
    %v1064 = vmul.f32 %v1061, 1.442695
    %v1065 = vpow.pop %v1064
    %v1066 = vadd.f32 %v1063, 1.0
    %v1067 = vadd.f32 %v1065, 1.0
    %v1068 = vrcp.pop %v1066
    %v1069 = vmul.f32 1.0, %v1068
    %v1070 = vrcp.pop %v1067
    %v1071 = vmul.f32 1.0, %v1070
    %v1072 = vtanh.pop %v1059
    %v1074 = vrot.slane %v996, 6
    %v1076 = vmul.f32 %v1069, %v1074
    %1078 = vrot.lane.b32.xlu0 %v1072, 64
    %v1079 = vpop.permute.xlu0 %1078
    %v1081 = vmul.f32 %v1069, %v1079
    %1083 = vrot.lane.b32.xlu0 %v1081, 64
    %v1084 = vpop.permute.xlu0 %1083
    %v1086 = vadd.f32 %v1076, %v1084
    %v1087 = vtanh.pop %v1086
    %1089 = vrot.lane.b32.xlu0 %v1087, 64
    %v1090 = vpop.permute.xlu0 %1089
    %v1092 = vmul.f32 %v1071, %v1090
    %v1093 = vld [vmem:[#allocation2 + $0x20] sm:$0x3]
    %v1094 = vld [vmem:[#allocation2 + $0x28] sm:$0x3]
    %v1095 = vpack.c.bf16 %v1092, %v1092
    %v1097 = vrot.slane %v1095, 3
    %v1099 = vsel %vm396, %v1097, 0
    %1101 = vmatprep.subr.bf16.mxu0 0
    %1102 = vmatpush1.bf16.msra.mxu0 0
    %1103 = vmatprep.subr.bf16.mxu0 0
    %1104 = vmatpush1.bf16.msra.mxu0 0
    %1105 = vmatprep.subr.bf16.mxu0 0
    %1106 = vmatpush1.bf16.msra.mxu0 0
    %1107 = vmatprep.subr.bf16.mxu0 0
    %1108 = vmatpush1.bf16.msra.mxu0 0
    %1109 = vmatprep.subr.bf16.mxu0 %v387
    %1110 = vmatpush1.bf16.msra.mxu0 %v386
    %1111 = vmatprep.subr.bf16.mxu0 %v385
    %1112 = vmatpush1.bf16.msra.mxu0 %v384
    %1113 = vmatprep.subr.bf16.mxu0 %v383
    %1114 = vmatpush1.bf16.msra.mxu0 %v382
    %1115 = vmatprep.subr.bf16.mxu0 %v381
    %1116 = vmatpush1.bf16.msra.mxu0 %v380
    %1117 = vmatprep.subr.bf16.mxu0 0
    %1118 = vmatpush2.bf16.msra.mxu0 0
    %1119 = vmatprep.subr.bf16.mxu0 0
    %1120 = vmatpush2.bf16.msra.mxu0 0
    %1121 = vmatprep.subr.bf16.mxu0 0
    %1122 = vmatpush2.bf16.msra.mxu0 0
    %1123 = vmatprep.subr.bf16.mxu0 0
    %1124 = vmatpush2.bf16.msra.mxu0 0
    %1125 = vmatprep.subr.bf16.mxu0 0
    %1126 = vmatpush2.bf16.msra.mxu0 0
    %1127 = vmatprep.subr.bf16.mxu0 0
    %1128 = vmatpush2.bf16.msra.mxu0 0
    %1129 = vmatprep.subr.bf16.mxu0 0
    %1130 = vmatpush2.bf16.msra.mxu0 0
    %1131 = vmatprep.subr.bf16.mxu0 0
    %1132 = vmatpush2.bf16.msra.mxu0 0
    %1133 = vmatprep.mubr.bf16.mxu0 0
    %1134 = vmatmul.mubr.bf16.gmra.mxu0 %v1099
    %v1135 = vpop.f32.mrf.mxu0
    %v1136 = vadd.f32 0.0, %v1135
    %v1137 = vpop.f32.mrf.mxu0
    %v1138 = vadd.f32 0.0, %v1137
    %v1139 = vpop.f32.mrf.mxu0
    %v1140 = vpop.f32.mrf.mxu0
    %1141 = vdwg.mxu0
    %v1142 = vadd.f32 %v1093, %v1136
    %v1143 = vadd.f32 %v1094, %v1138
    %v1144 = vxor.u32 %v1142, 2147483648
    %v1145 = vxor.u32 %v1143, 2147483648
    %v1146 = vmul.f32 %v1144, 1.442695
    %v1147 = vpow.pop %v1146
    %v1148 = vmul.f32 %v1145, 1.442695
    %v1149 = vpow.pop %v1148
    %v1150 = vadd.f32 %v1147, 1.0
    %v1151 = vadd.f32 %v1149, 1.0
    %v1152 = vrcp.pop %v1150
    %v1153 = vmul.f32 1.0, %v1152
    %v1154 = vrcp.pop %v1151
    %v1155 = vmul.f32 1.0, %v1154
    %v1156 = vtanh.pop %v1143
    %v1158 = vrot.slane %v1086, 6
    %v1160 = vmul.f32 %v1153, %v1158
    %1162 = vrot.lane.b32.xlu0 %v1156, 64
    %v1163 = vpop.permute.xlu0 %1162
    %v1165 = vmul.f32 %v1153, %v1163
    %1167 = vrot.lane.b32.xlu0 %v1165, 64
    %v1168 = vpop.permute.xlu0 %1167
    %v1170 = vadd.f32 %v1160, %v1168
    %v1171 = vtanh.pop %v1170
    %1173 = vrot.lane.b32.xlu0 %v1171, 64
    %v1174 = vpop.permute.xlu0 %1173
    %v1176 = vmul.f32 %v1155, %v1174
    %v1177 = vld [vmem:[#allocation2 + $0x20] sm:$0xc]
    %v1178 = vld [vmem:[#allocation2 + $0x28] sm:$0xc]
    %v1179 = vpack.c.bf16 %v1176, %v1176
    %v1181 = vsel %vm396, %v1179, 0
    %1183 = vmatprep.subr.bf16.mxu0 0
    %1184 = vmatpush1.bf16.msra.mxu0 0
    %1185 = vmatprep.subr.bf16.mxu0 0
    %1186 = vmatpush1.bf16.msra.mxu0 0
    %1187 = vmatprep.subr.bf16.mxu0 0
    %1188 = vmatpush1.bf16.msra.mxu0 0
    %1189 = vmatprep.subr.bf16.mxu0 0
    %1190 = vmatpush1.bf16.msra.mxu0 0
    %1191 = vmatprep.subr.bf16.mxu0 %v387
    %1192 = vmatpush1.bf16.msra.mxu0 %v386
    %1193 = vmatprep.subr.bf16.mxu0 %v385
    %1194 = vmatpush1.bf16.msra.mxu0 %v384
    %1195 = vmatprep.subr.bf16.mxu0 %v383
    %1196 = vmatpush1.bf16.msra.mxu0 %v382
    %1197 = vmatprep.subr.bf16.mxu0 %v381
    %1198 = vmatpush1.bf16.msra.mxu0 %v380
    %1199 = vmatprep.subr.bf16.mxu0 0
    %1200 = vmatpush2.bf16.msra.mxu0 0
    %1201 = vmatprep.subr.bf16.mxu0 0
    %1202 = vmatpush2.bf16.msra.mxu0 0
    %1203 = vmatprep.subr.bf16.mxu0 0
    %1204 = vmatpush2.bf16.msra.mxu0 0
    %1205 = vmatprep.subr.bf16.mxu0 0
    %1206 = vmatpush2.bf16.msra.mxu0 0
    %1207 = vmatprep.subr.bf16.mxu0 0
    %1208 = vmatpush2.bf16.msra.mxu0 0
    %1209 = vmatprep.subr.bf16.mxu0 0
    %1210 = vmatpush2.bf16.msra.mxu0 0
    %1211 = vmatprep.subr.bf16.mxu0 0
    %1212 = vmatpush2.bf16.msra.mxu0 0
    %1213 = vmatprep.subr.bf16.mxu0 0
    %1214 = vmatpush2.bf16.msra.mxu0 0
    %1215 = vmatprep.mubr.bf16.mxu0 0
    %1216 = vmatmul.mubr.bf16.gmra.mxu0 %v1181
    %v1217 = vpop.f32.mrf.mxu0
    %v1218 = vadd.f32 0.0, %v1217
    %v1219 = vpop.f32.mrf.mxu0
    %v1220 = vadd.f32 0.0, %v1219
    %v1221 = vpop.f32.mrf.mxu0
    %v1222 = vpop.f32.mrf.mxu0
    %1223 = vdwg.mxu0
    %v1226 = vrot.slane %v1218, 6
    %v1227 = vrot.slane %v1220, 6
    %v1230 = vadd.f32 %v1177, %v1226
    %v1231 = vadd.f32 %v1178, %v1227
    %v1232 = vxor.u32 %v1230, 2147483648
    %v1233 = vxor.u32 %v1231, 2147483648
    %v1234 = vmul.f32 %v1232, 1.442695
    %v1235 = vpow.pop %v1234
    %v1236 = vmul.f32 %v1233, 1.442695
    %v1237 = vpow.pop %v1236
    %v1238 = vadd.f32 %v1235, 1.0
    %v1239 = vadd.f32 %v1237, 1.0
    %v1240 = vrcp.pop %v1238
    %v1241 = vmul.f32 1.0, %v1240
    %v1242 = vrcp.pop %v1239
    %v1243 = vmul.f32 1.0, %v1242
    %v1244 = vtanh.pop %v1231
    %v1246 = vrot.slane %v1170, 6
    %v1248 = vmul.f32 %v1241, %v1246
    %1250 = vrot.lane.b32.xlu0 %v1244, 64
    %v1251 = vpop.permute.xlu0 %1250
    %v1253 = vmul.f32 %v1241, %v1251
    %1255 = vrot.lane.b32.xlu0 %v1253, 64
    %v1256 = vpop.permute.xlu0 %1255
    %v1258 = vadd.f32 %v1248, %v1256
    %v1259 = vtanh.pop %v1258
    %1261 = vrot.lane.b32.xlu0 %v1259, 64
    %v1262 = vpop.permute.xlu0 %1261
    %v1264 = vmul.f32 %v1243, %v1262
    %v1265 = vld [vmem:[#allocation2 + $0x20] sm:$0x30]
    %v1266 = vld [vmem:[#allocation2 + $0x28] sm:$0x30]
    %v1267 = vpack.c.bf16 %v1264, %v1264
    %v1269 = vrot.slane %v1267, 1
    %v1271 = vsel %vm396, %v1269, 0
    %1273 = vmatprep.subr.bf16.mxu0 0
    %1274 = vmatpush1.bf16.msra.mxu0 0
    %1275 = vmatprep.subr.bf16.mxu0 0
    %1276 = vmatpush1.bf16.msra.mxu0 0
    %1277 = vmatprep.subr.bf16.mxu0 0
    %1278 = vmatpush1.bf16.msra.mxu0 0
    %1279 = vmatprep.subr.bf16.mxu0 0
    %1280 = vmatpush1.bf16.msra.mxu0 0
    %1281 = vmatprep.subr.bf16.mxu0 %v387
    %1282 = vmatpush1.bf16.msra.mxu0 %v386
    %1283 = vmatprep.subr.bf16.mxu0 %v385
    %1284 = vmatpush1.bf16.msra.mxu0 %v384
    %1285 = vmatprep.subr.bf16.mxu0 %v383
    %1286 = vmatpush1.bf16.msra.mxu0 %v382
    %1287 = vmatprep.subr.bf16.mxu0 %v381
    %1288 = vmatpush1.bf16.msra.mxu0 %v380
    %1289 = vmatprep.subr.bf16.mxu0 0
    %1290 = vmatpush2.bf16.msra.mxu0 0
    %1291 = vmatprep.subr.bf16.mxu0 0
    %1292 = vmatpush2.bf16.msra.mxu0 0
    %1293 = vmatprep.subr.bf16.mxu0 0
    %1294 = vmatpush2.bf16.msra.mxu0 0
    %1295 = vmatprep.subr.bf16.mxu0 0
    %1296 = vmatpush2.bf16.msra.mxu0 0
    %1297 = vmatprep.subr.bf16.mxu0 0
    %1298 = vmatpush2.bf16.msra.mxu0 0
    %1299 = vmatprep.subr.bf16.mxu0 0
    %1300 = vmatpush2.bf16.msra.mxu0 0
    %1301 = vmatprep.subr.bf16.mxu0 0
    %1302 = vmatpush2.bf16.msra.mxu0 0
    %1303 = vmatprep.subr.bf16.mxu0 0
    %1304 = vmatpush2.bf16.msra.mxu0 0
    %1305 = vmatprep.mubr.bf16.mxu0 0
    %1306 = vmatmul.mubr.bf16.gmra.mxu0 %v1271
    %v1307 = vpop.f32.mrf.mxu0
    %v1308 = vadd.f32 0.0, %v1307
    %v1309 = vpop.f32.mrf.mxu0
    %v1310 = vadd.f32 0.0, %v1309
    %v1311 = vpop.f32.mrf.mxu0
    %v1312 = vpop.f32.mrf.mxu0
    %1313 = vdwg.mxu0
    %v1316 = vrot.slane %v1308, 4
    %v1317 = vrot.slane %v1310, 4
    %v1320 = vadd.f32 %v1265, %v1316
    %v1321 = vadd.f32 %v1266, %v1317
    %v1322 = vxor.u32 %v1320, 2147483648
    %v1323 = vxor.u32 %v1321, 2147483648
    %v1324 = vmul.f32 %v1322, 1.442695
    %v1325 = vpow.pop %v1324
    %v1326 = vmul.f32 %v1323, 1.442695
    %v1327 = vpow.pop %v1326
    %v1328 = vadd.f32 %v1325, 1.0
    %v1329 = vadd.f32 %v1327, 1.0
    %v1330 = vrcp.pop %v1328
    %v1331 = vmul.f32 1.0, %v1330
    %v1332 = vrcp.pop %v1329
    %v1333 = vmul.f32 1.0, %v1332
    %v1334 = vtanh.pop %v1321
    %v1336 = vrot.slane %v1258, 6
    %v1338 = vmul.f32 %v1331, %v1336
    %1340 = vrot.lane.b32.xlu0 %v1334, 64
    %v1341 = vpop.permute.xlu0 %1340
    %v1343 = vmul.f32 %v1331, %v1341
    %1345 = vrot.lane.b32.xlu0 %v1343, 64
    %v1346 = vpop.permute.xlu0 %1345
    %v1348 = vadd.f32 %v1338, %v1346
    %v1349 = vtanh.pop %v1348
    %1351 = vrot.lane.b32.xlu0 %v1349, 64
    %v1352 = vpop.permute.xlu0 %1351
    %v1354 = vmul.f32 %v1333, %v1352
    %v1355 = vld [vmem:[#allocation2 + $0x20] sm:$0xc0]
    %v1356 = vld [vmem:[#allocation2 + $0x28] sm:$0xc0]
    %v1357 = vpack.c.bf16 %v1354, %v1354
    %v1359 = vrot.slane %v1357, 2
    %v1361 = vsel %vm396, %v1359, 0
    %1363 = vmatprep.subr.bf16.mxu0 0
    %1364 = vmatpush1.bf16.msra.mxu0 0
    %1365 = vmatprep.subr.bf16.mxu0 0
    %1366 = vmatpush1.bf16.msra.mxu0 0
    %1367 = vmatprep.subr.bf16.mxu0 0
    %1368 = vmatpush1.bf16.msra.mxu0 0
    %1369 = vmatprep.subr.bf16.mxu0 0
    %1370 = vmatpush1.bf16.msra.mxu0 0
    %1371 = vmatprep.subr.bf16.mxu0 %v387
    %1372 = vmatpush1.bf16.msra.mxu0 %v386
    %1373 = vmatprep.subr.bf16.mxu0 %v385
    %1374 = vmatpush1.bf16.msra.mxu0 %v384
    %1375 = vmatprep.subr.bf16.mxu0 %v383
    %1376 = vmatpush1.bf16.msra.mxu0 %v382
    %1377 = vmatprep.subr.bf16.mxu0 %v381
    %1378 = vmatpush1.bf16.msra.mxu0 %v380
    %1379 = vmatprep.subr.bf16.mxu0 0
    %1380 = vmatpush2.bf16.msra.mxu0 0
    %1381 = vmatprep.subr.bf16.mxu0 0
    %1382 = vmatpush2.bf16.msra.mxu0 0
    %1383 = vmatprep.subr.bf16.mxu0 0
    %1384 = vmatpush2.bf16.msra.mxu0 0
    %1385 = vmatprep.subr.bf16.mxu0 0
    %1386 = vmatpush2.bf16.msra.mxu0 0
    %1387 = vmatprep.subr.bf16.mxu0 0
    %1388 = vmatpush2.bf16.msra.mxu0 0
    %1389 = vmatprep.subr.bf16.mxu0 0
    %1390 = vmatpush2.bf16.msra.mxu0 0
    %1391 = vmatprep.subr.bf16.mxu0 0
    %1392 = vmatpush2.bf16.msra.mxu0 0
    %1393 = vmatprep.subr.bf16.mxu0 0
    %1394 = vmatpush2.bf16.msra.mxu0 0
    %1395 = vmatprep.mubr.bf16.mxu0 0
    %1396 = vmatmul.mubr.bf16.gmra.mxu0 %v1361
    %v1397 = vpop.f32.mrf.mxu0
    %v1398 = vadd.f32 0.0, %v1397
    %v1399 = vpop.f32.mrf.mxu0
    %v1400 = vadd.f32 0.0, %v1399
    %v1401 = vpop.f32.mrf.mxu0
    %v1402 = vpop.f32.mrf.mxu0
    %1403 = vdwg.mxu0
    %v1406 = vrot.slane %v1398, 2
    %v1407 = vrot.slane %v1400, 2
    %v1410 = vadd.f32 %v1355, %v1406
    %v1411 = vadd.f32 %v1356, %v1407
    %v1412 = vxor.u32 %v1410, 2147483648
    %v1413 = vxor.u32 %v1411, 2147483648
    %v1414 = vmul.f32 %v1412, 1.442695
    %v1415 = vpow.pop %v1414
    %v1416 = vmul.f32 %v1413, 1.442695
    %v1417 = vpow.pop %v1416
    %v1418 = vadd.f32 %v1415, 1.0
    %v1419 = vadd.f32 %v1417, 1.0
    %v1420 = vrcp.pop %v1418
    %v1421 = vmul.f32 1.0, %v1420
    %v1422 = vrcp.pop %v1419
    %v1423 = vmul.f32 1.0, %v1422
    %v1424 = vtanh.pop %v1411
    %v1426 = vrot.slane %v1348, 6
    %v1428 = vmul.f32 %v1421, %v1426
    %1430 = vrot.lane.b32.xlu0 %v1424, 64
    %v1431 = vpop.permute.xlu0 %1430
    %v1433 = vmul.f32 %v1421, %v1431
    %1435 = vrot.lane.b32.xlu0 %v1433, 64
    %v1436 = vpop.permute.xlu0 %1435
    %v1438 = vadd.f32 %v1428, %v1436
    %v1439 = vtanh.pop %v1438
    %1441 = vrot.lane.b32.xlu0 %v1439, 64
    %v1442 = vpop.permute.xlu0 %1441
    %v1444 = vmul.f32 %v1423, %v1442
    %v1445 = vld [vmem:[#allocation2 + $0x30] sm:$0x3]
    %v1446 = vld [vmem:[#allocation2 + $0x38] sm:$0x3]
    %v1447 = vpack.c.bf16 %v1444, %v1444
    %v1449 = vrot.slane %v1447, 3
    %v1451 = vsel %vm396, %v1449, 0
    %1453 = vmatprep.subr.bf16.mxu0 0
    %1454 = vmatpush1.bf16.msra.mxu0 0
    %1455 = vmatprep.subr.bf16.mxu0 0
    %1456 = vmatpush1.bf16.msra.mxu0 0
    %1457 = vmatprep.subr.bf16.mxu0 0
    %1458 = vmatpush1.bf16.msra.mxu0 0
    %1459 = vmatprep.subr.bf16.mxu0 0
    %1460 = vmatpush1.bf16.msra.mxu0 0
    %1461 = vmatprep.subr.bf16.mxu0 %v387
    %1462 = vmatpush1.bf16.msra.mxu0 %v386
    %1463 = vmatprep.subr.bf16.mxu0 %v385
    %1464 = vmatpush1.bf16.msra.mxu0 %v384
    %1465 = vmatprep.subr.bf16.mxu0 %v383
    %1466 = vmatpush1.bf16.msra.mxu0 %v382
    %1467 = vmatprep.subr.bf16.mxu0 %v381
    %1468 = vmatpush1.bf16.msra.mxu0 %v380
    %1469 = vmatprep.subr.bf16.mxu0 0
    %1470 = vmatpush2.bf16.msra.mxu0 0
    %1471 = vmatprep.subr.bf16.mxu0 0
    %1472 = vmatpush2.bf16.msra.mxu0 0
    %1473 = vmatprep.subr.bf16.mxu0 0
    %1474 = vmatpush2.bf16.msra.mxu0 0
    %1475 = vmatprep.subr.bf16.mxu0 0
    %1476 = vmatpush2.bf16.msra.mxu0 0
    %1477 = vmatprep.subr.bf16.mxu0 0
    %1478 = vmatpush2.bf16.msra.mxu0 0
    %1479 = vmatprep.subr.bf16.mxu0 0
    %1480 = vmatpush2.bf16.msra.mxu0 0
    %1481 = vmatprep.subr.bf16.mxu0 0
    %1482 = vmatpush2.bf16.msra.mxu0 0
    %1483 = vmatprep.subr.bf16.mxu0 0
    %1484 = vmatpush2.bf16.msra.mxu0 0
    %1485 = vmatprep.mubr.bf16.mxu0 0
    %1486 = vmatmul.mubr.bf16.gmra.mxu0 %v1451
    %v1487 = vpop.f32.mrf.mxu0
    %v1488 = vadd.f32 0.0, %v1487
    %v1489 = vpop.f32.mrf.mxu0
    %v1490 = vadd.f32 0.0, %v1489
    %v1491 = vpop.f32.mrf.mxu0
    %v1492 = vpop.f32.mrf.mxu0
    %1493 = vdwg.mxu0
    %v1494 = vadd.f32 %v1445, %v1488
    %v1495 = vadd.f32 %v1446, %v1490
    %v1496 = vxor.u32 %v1494, 2147483648
    %v1497 = vxor.u32 %v1495, 2147483648
    %v1498 = vmul.f32 %v1496, 1.442695
    %v1499 = vpow.pop %v1498
    %v1500 = vmul.f32 %v1497, 1.442695
    %v1501 = vpow.pop %v1500
    %v1502 = vadd.f32 %v1499, 1.0
    %v1503 = vadd.f32 %v1501, 1.0
    %v1504 = vrcp.pop %v1502
    %v1505 = vmul.f32 1.0, %v1504
    %v1506 = vrcp.pop %v1503
    %v1507 = vmul.f32 1.0, %v1506
    %v1508 = vtanh.pop %v1495
    %v1510 = vrot.slane %v1438, 6
    %v1512 = vmul.f32 %v1505, %v1510
    %1514 = vrot.lane.b32.xlu0 %v1508, 64
    %v1515 = vpop.permute.xlu0 %1514
    %v1517 = vmul.f32 %v1505, %v1515
    %1519 = vrot.lane.b32.xlu0 %v1517, 64
    %v1520 = vpop.permute.xlu0 %1519
    %v1522 = vadd.f32 %v1512, %v1520
    %v1523 = vtanh.pop %v1522
    %1525 = vrot.lane.b32.xlu0 %v1523, 64
    %v1526 = vpop.permute.xlu0 %1525
    %v1528 = vmul.f32 %v1507, %v1526
    %v1529 = vld [vmem:[#allocation2 + $0x30] sm:$0xc]
    %v1530 = vld [vmem:[#allocation2 + $0x38] sm:$0xc]
    %v1531 = vpack.c.bf16 %v1528, %v1528
    %v1533 = vsel %vm396, %v1531, 0
    %1535 = vmatprep.subr.bf16.mxu0 0
    %1536 = vmatpush1.bf16.msra.mxu0 0
    %1537 = vmatprep.subr.bf16.mxu0 0
    %1538 = vmatpush1.bf16.msra.mxu0 0
    %1539 = vmatprep.subr.bf16.mxu0 0
    %1540 = vmatpush1.bf16.msra.mxu0 0
    %1541 = vmatprep.subr.bf16.mxu0 0
    %1542 = vmatpush1.bf16.msra.mxu0 0
    %1543 = vmatprep.subr.bf16.mxu0 %v387
    %1544 = vmatpush1.bf16.msra.mxu0 %v386
    %1545 = vmatprep.subr.bf16.mxu0 %v385
    %1546 = vmatpush1.bf16.msra.mxu0 %v384
    %1547 = vmatprep.subr.bf16.mxu0 %v383
    %1548 = vmatpush1.bf16.msra.mxu0 %v382
    %1549 = vmatprep.subr.bf16.mxu0 %v381
    %1550 = vmatpush1.bf16.msra.mxu0 %v380
    %1551 = vmatprep.subr.bf16.mxu0 0
    %1552 = vmatpush2.bf16.msra.mxu0 0
    %1553 = vmatprep.subr.bf16.mxu0 0
    %1554 = vmatpush2.bf16.msra.mxu0 0
    %1555 = vmatprep.subr.bf16.mxu0 0
    %1556 = vmatpush2.bf16.msra.mxu0 0
    %1557 = vmatprep.subr.bf16.mxu0 0
    %1558 = vmatpush2.bf16.msra.mxu0 0
    %1559 = vmatprep.subr.bf16.mxu0 0
    %1560 = vmatpush2.bf16.msra.mxu0 0
    %1561 = vmatprep.subr.bf16.mxu0 0
    %1562 = vmatpush2.bf16.msra.mxu0 0
    %1563 = vmatprep.subr.bf16.mxu0 0
    %1564 = vmatpush2.bf16.msra.mxu0 0
    %1565 = vmatprep.subr.bf16.mxu0 0
    %1566 = vmatpush2.bf16.msra.mxu0 0
    %1567 = vmatprep.mubr.bf16.mxu0 0
    %1568 = vmatmul.mubr.bf16.gmra.mxu0 %v1533
    %v1569 = vpop.f32.mrf.mxu0
    %v1570 = vadd.f32 0.0, %v1569
    %v1571 = vpop.f32.mrf.mxu0
    %v1572 = vadd.f32 0.0, %v1571
    %v1573 = vpop.f32.mrf.mxu0
    %v1574 = vpop.f32.mrf.mxu0
    %1575 = vdwg.mxu0
    %v1578 = vrot.slane %v1570, 6
    %v1579 = vrot.slane %v1572, 6
    %v1582 = vadd.f32 %v1529, %v1578
    %v1583 = vadd.f32 %v1530, %v1579
    %v1584 = vxor.u32 %v1582, 2147483648
    %v1585 = vxor.u32 %v1583, 2147483648
    %v1586 = vmul.f32 %v1584, 1.442695
    %v1587 = vpow.pop %v1586
    %v1588 = vmul.f32 %v1585, 1.442695
    %v1589 = vpow.pop %v1588
    %v1590 = vadd.f32 %v1587, 1.0
    %v1591 = vadd.f32 %v1589, 1.0
    %v1592 = vrcp.pop %v1590
    %v1593 = vmul.f32 1.0, %v1592
    %v1594 = vrcp.pop %v1591
    %v1595 = vmul.f32 1.0, %v1594
    %v1596 = vtanh.pop %v1583
    %v1598 = vrot.slane %v1522, 6
    %v1600 = vmul.f32 %v1593, %v1598
    %1602 = vrot.lane.b32.xlu0 %v1596, 64
    %v1603 = vpop.permute.xlu0 %1602
    %v1605 = vmul.f32 %v1593, %v1603
    %1607 = vrot.lane.b32.xlu0 %v1605, 64
    %v1608 = vpop.permute.xlu0 %1607
    %v1610 = vadd.f32 %v1600, %v1608
    %v1611 = vtanh.pop %v1610
    %1613 = vrot.lane.b32.xlu0 %v1611, 64
    %v1614 = vpop.permute.xlu0 %1613
    %v1616 = vmul.f32 %v1595, %v1614
    %v1617 = vld [vmem:[#allocation2 + $0x30] sm:$0x30]
    %v1618 = vld [vmem:[#allocation2 + $0x38] sm:$0x30]
    %v1619 = vpack.c.bf16 %v1616, %v1616
    %v1621 = vrot.slane %v1619, 1
    %v1623 = vsel %vm396, %v1621, 0
    %1625 = vmatprep.subr.bf16.mxu0 0
    %1626 = vmatpush1.bf16.msra.mxu0 0
    %1627 = vmatprep.subr.bf16.mxu0 0
    %1628 = vmatpush1.bf16.msra.mxu0 0
    %1629 = vmatprep.subr.bf16.mxu0 0
    %1630 = vmatpush1.bf16.msra.mxu0 0
    %1631 = vmatprep.subr.bf16.mxu0 0
    %1632 = vmatpush1.bf16.msra.mxu0 0
    %1633 = vmatprep.subr.bf16.mxu0 %v387
    %1634 = vmatpush1.bf16.msra.mxu0 %v386
    %1635 = vmatprep.subr.bf16.mxu0 %v385
    %1636 = vmatpush1.bf16.msra.mxu0 %v384
    %1637 = vmatprep.subr.bf16.mxu0 %v383
    %1638 = vmatpush1.bf16.msra.mxu0 %v382
    %1639 = vmatprep.subr.bf16.mxu0 %v381
    %1640 = vmatpush1.bf16.msra.mxu0 %v380
    %1641 = vmatprep.subr.bf16.mxu0 0
    %1642 = vmatpush2.bf16.msra.mxu0 0
    %1643 = vmatprep.subr.bf16.mxu0 0
    %1644 = vmatpush2.bf16.msra.mxu0 0
    %1645 = vmatprep.subr.bf16.mxu0 0
    %1646 = vmatpush2.bf16.msra.mxu0 0
    %1647 = vmatprep.subr.bf16.mxu0 0
    %1648 = vmatpush2.bf16.msra.mxu0 0
    %1649 = vmatprep.subr.bf16.mxu0 0
    %1650 = vmatpush2.bf16.msra.mxu0 0
    %1651 = vmatprep.subr.bf16.mxu0 0
    %1652 = vmatpush2.bf16.msra.mxu0 0
    %1653 = vmatprep.subr.bf16.mxu0 0
    %1654 = vmatpush2.bf16.msra.mxu0 0
    %1655 = vmatprep.subr.bf16.mxu0 0
    %1656 = vmatpush2.bf16.msra.mxu0 0
    %1657 = vmatprep.mubr.bf16.mxu0 0
    %1658 = vmatmul.mubr.bf16.gmra.mxu0 %v1623
    %v1659 = vpop.f32.mrf.mxu0
    %v1660 = vadd.f32 0.0, %v1659
    %v1661 = vpop.f32.mrf.mxu0
    %v1662 = vadd.f32 0.0, %v1661
    %v1663 = vpop.f32.mrf.mxu0
    %v1664 = vpop.f32.mrf.mxu0
    %1665 = vdwg.mxu0
    %v1668 = vrot.slane %v1660, 4
    %v1669 = vrot.slane %v1662, 4
    %v1672 = vadd.f32 %v1617, %v1668
    %v1673 = vadd.f32 %v1618, %v1669
    %v1674 = vxor.u32 %v1672, 2147483648
    %v1675 = vxor.u32 %v1673, 2147483648
    %v1676 = vmul.f32 %v1674, 1.442695
    %v1677 = vpow.pop %v1676
    %v1678 = vmul.f32 %v1675, 1.442695
    %v1679 = vpow.pop %v1678
    %v1680 = vadd.f32 %v1677, 1.0
    %v1681 = vadd.f32 %v1679, 1.0
    %v1682 = vrcp.pop %v1680
    %v1683 = vmul.f32 1.0, %v1682
    %v1684 = vrcp.pop %v1681
    %v1685 = vmul.f32 1.0, %v1684
    %v1686 = vtanh.pop %v1673
    %v1688 = vrot.slane %v1610, 6
    %v1690 = vmul.f32 %v1683, %v1688
    %1692 = vrot.lane.b32.xlu0 %v1686, 64
    %v1693 = vpop.permute.xlu0 %1692
    %v1695 = vmul.f32 %v1683, %v1693
    %1697 = vrot.lane.b32.xlu0 %v1695, 64
    %v1698 = vpop.permute.xlu0 %1697
    %v1700 = vadd.f32 %v1690, %v1698
    %v1701 = vtanh.pop %v1700
    %1703 = vrot.lane.b32.xlu0 %v1701, 64
    %v1704 = vpop.permute.xlu0 %1703
    %v1706 = vmul.f32 %v1685, %v1704
    %v1707 = vld [vmem:[#allocation2 + $0x30] sm:$0xc0]
    %v1708 = vld [vmem:[#allocation2 + $0x38] sm:$0xc0]
    %v1709 = vpack.c.bf16 %v1706, %v1706
    %v1711 = vrot.slane %v1709, 2
    %v1713 = vsel %vm396, %v1711, 0
    %1715 = vmatprep.subr.bf16.mxu0 0
    %1716 = vmatpush1.bf16.msra.mxu0 0
    %1717 = vmatprep.subr.bf16.mxu0 0
    %1718 = vmatpush1.bf16.msra.mxu0 0
    %1719 = vmatprep.subr.bf16.mxu0 0
    %1720 = vmatpush1.bf16.msra.mxu0 0
    %1721 = vmatprep.subr.bf16.mxu0 0
    %1722 = vmatpush1.bf16.msra.mxu0 0
    %1723 = vmatprep.subr.bf16.mxu0 %v387
    %1724 = vmatpush1.bf16.msra.mxu0 %v386
    %1725 = vmatprep.subr.bf16.mxu0 %v385
    %1726 = vmatpush1.bf16.msra.mxu0 %v384
    %1727 = vmatprep.subr.bf16.mxu0 %v383
    %1728 = vmatpush1.bf16.msra.mxu0 %v382
    %1729 = vmatprep.subr.bf16.mxu0 %v381
    %1730 = vmatpush1.bf16.msra.mxu0 %v380
    %1731 = vmatprep.subr.bf16.mxu0 0
    %1732 = vmatpush2.bf16.msra.mxu0 0
    %1733 = vmatprep.subr.bf16.mxu0 0
    %1734 = vmatpush2.bf16.msra.mxu0 0
    %1735 = vmatprep.subr.bf16.mxu0 0
    %1736 = vmatpush2.bf16.msra.mxu0 0
    %1737 = vmatprep.subr.bf16.mxu0 0
    %1738 = vmatpush2.bf16.msra.mxu0 0
    %1739 = vmatprep.subr.bf16.mxu0 0
    %1740 = vmatpush2.bf16.msra.mxu0 0
    %1741 = vmatprep.subr.bf16.mxu0 0
    %1742 = vmatpush2.bf16.msra.mxu0 0
    %1743 = vmatprep.subr.bf16.mxu0 0
    %1744 = vmatpush2.bf16.msra.mxu0 0
    %1745 = vmatprep.subr.bf16.mxu0 0
    %1746 = vmatpush2.bf16.msra.mxu0 0
    %1747 = vmatprep.mubr.bf16.mxu0 0
    %1748 = vmatmul.mubr.bf16.gmra.mxu0 %v1713
    %v1749 = vpop.f32.mrf.mxu0
    %v1750 = vadd.f32 0.0, %v1749
    %v1751 = vpop.f32.mrf.mxu0
    %v1752 = vadd.f32 0.0, %v1751
    %v1753 = vpop.f32.mrf.mxu0
    %v1754 = vpop.f32.mrf.mxu0
    %1755 = vdwg.mxu0
    %v1758 = vrot.slane %v1750, 2
    %v1759 = vrot.slane %v1752, 2
    %v1762 = vadd.f32 %v1707, %v1758
    %v1763 = vadd.f32 %v1708, %v1759
    %v1764 = vxor.u32 %v1762, 2147483648
    %v1765 = vxor.u32 %v1763, 2147483648
    %v1766 = vmul.f32 %v1764, 1.442695
    %v1767 = vpow.pop %v1766
    %v1768 = vmul.f32 %v1765, 1.442695
    %v1769 = vpow.pop %v1768
    %v1770 = vadd.f32 %v1767, 1.0
    %v1771 = vadd.f32 %v1769, 1.0
    %v1772 = vrcp.pop %v1770
    %v1773 = vmul.f32 1.0, %v1772
    %v1774 = vrcp.pop %v1771
    %v1775 = vmul.f32 1.0, %v1774
    %v1776 = vtanh.pop %v1763
    %v1778 = vrot.slane %v1700, 6
    %v1780 = vmul.f32 %v1773, %v1778
    %1782 = vrot.lane.b32.xlu0 %v1776, 64
    %v1783 = vpop.permute.xlu0 %1782
    %v1785 = vmul.f32 %v1773, %v1783
    %1787 = vrot.lane.b32.xlu0 %v1785, 64
    %v1788 = vpop.permute.xlu0 %1787
    %v1790 = vadd.f32 %v1780, %v1788
    %v1791 = vtanh.pop %v1790
    %1793 = vrot.lane.b32.xlu0 %v1791, 64
    %v1794 = vpop.permute.xlu0 %1793
    %v1796 = vmul.f32 %v1775, %v1794
    %v1797 = vpack.c.bf16 %v160, %v160
    %v1798 = vld [vmem:[%s3 + $0x10] sm:$0xf]
    %v1799 = vld [vmem:[%s3 + $0x14] sm:$0xf]
    %v1800 = vld [vmem:[%s3 + $0x18] sm:$0xf]
    %v1801 = vld [vmem:[%s3 + $0x1c] sm:$0xf]
    %v1802 = vld [vmem:[%s3 + $0x20] sm:$0xf]
    %v1803 = vld [vmem:[%s3 + $0x24] sm:$0xf]
    %v1804 = vld [vmem:[%s3 + $0x28] sm:$0xf]
    %v1805 = vld [vmem:[%s3 + $0x2c] sm:$0xf]
    %v1806 = vpack.c.bf16 %v1796, %v1796
    %v1807 = vld [vmem:[%s3 + $0x30] sm:$0xf]
    %v1808 = vld [vmem:[%s3 + $0x34] sm:$0xf]
    %v1809 = vld [vmem:[%s3 + $0x38] sm:$0xf]
    %v1810 = vld [vmem:[%s3 + $0x3c] sm:$0xf]
    %v1811 = vld [vmem:[%s3 + $0x40] sm:$0xf]
    %v1812 = vld [vmem:[%s3 + $0x44] sm:$0xf]
    %v1813 = vld [vmem:[%s3 + $0x48] sm:$0xf]
    %v1814 = vld [vmem:[%s3 + $0x4c] sm:$0xf]
    %v1816 = vrot.slane %v1806, 3
    %v1825 = vunpack.c.l.b16 %v1807
    %v1826 = vunpack.c.l.b16 %v1808
    %v1827 = vunpack.c.l.b16 %v1809
    %v1828 = vunpack.c.l.b16 %v1810
    %v1829 = vunpack.c.l.b16 %v1811
    %v1830 = vunpack.c.l.b16 %v1812
    %v1831 = vunpack.c.l.b16 %v1813
    %v1832 = vunpack.c.l.b16 %v1814
    %v1833 = vpack.c.b16 %v1826, %v1825
    %v1834 = vpack.c.b16 %v1828, %v1827
    %v1835 = vpack.c.b16 %v1830, %v1829
    %v1836 = vpack.c.b16 %v1832, %v1831
    %v1842 = vsel %vm396, %v1816, 0
    %1844 = vmatprep.subr.bf16.mxu0 0
    %1845 = vmatpush1.bf16.msra.mxu0 0
    %1846 = vmatprep.subr.bf16.mxu0 0
    %1847 = vmatpush1.bf16.msra.mxu0 0
    %1848 = vmatprep.subr.bf16.mxu0 0
    %1849 = vmatpush1.bf16.msra.mxu0 0
    %1850 = vmatprep.subr.bf16.mxu0 0
    %1851 = vmatpush1.bf16.msra.mxu0 0
    %1852 = vmatprep.subr.bf16.mxu0 0
    %1853 = vmatpush1.bf16.msra.mxu0 %v1836
    %1854 = vmatprep.subr.bf16.mxu0 0
    %1855 = vmatpush1.bf16.msra.mxu0 %v1835
    %1856 = vmatprep.subr.bf16.mxu0 0
    %1857 = vmatpush1.bf16.msra.mxu0 %v1834
    %1858 = vmatprep.subr.bf16.mxu0 0
    %1859 = vmatpush1.bf16.msra.mxu0 %v1833
    %1860 = vmatprep.subr.bf16.mxu0 0
    %1861 = vmatpush2.bf16.msra.mxu0 0
    %1862 = vmatprep.subr.bf16.mxu0 0
    %1863 = vmatpush2.bf16.msra.mxu0 0
    %1864 = vmatprep.subr.bf16.mxu0 0
    %1865 = vmatpush2.bf16.msra.mxu0 0
    %1866 = vmatprep.subr.bf16.mxu0 0
    %1867 = vmatpush2.bf16.msra.mxu0 0
    %1868 = vmatprep.subr.bf16.mxu0 0
    %1869 = vmatpush2.bf16.msra.mxu0 0
    %1870 = vmatprep.subr.bf16.mxu0 0
    %1871 = vmatpush2.bf16.msra.mxu0 0
    %1872 = vmatprep.subr.bf16.mxu0 0
    %1873 = vmatpush2.bf16.msra.mxu0 0
    %1874 = vmatprep.subr.bf16.mxu0 0
    %1875 = vmatpush2.bf16.msra.mxu0 0
    %1876 = vmatprep.mubr.bf16.mxu0 0
    %1877 = vmatmul.mubr.bf16.gmra.mxu0 %v1842
    %v1878 = vpop.f32.mrf.mxu0
    %v1879 = vadd.f32 0.0, %v1878
    %v1880 = vpop.f32.mrf.mxu0
    %v1881 = vpop.f32.mrf.mxu0
    %v1882 = vpop.f32.mrf.mxu0
    %1883 = vdwg.mxu0
    %v1892 = vunpack.c.l.b16 %v1798
    %v1893 = vunpack.c.l.b16 %v1799
    %v1894 = vunpack.c.l.b16 %v1800
    %v1895 = vunpack.c.l.b16 %v1801
    %v1896 = vunpack.c.l.b16 %v1802
    %v1897 = vunpack.c.l.b16 %v1803
    %v1898 = vunpack.c.l.b16 %v1804
    %v1899 = vunpack.c.l.b16 %v1805
    %v1900 = vpack.c.b16 %v1893, %v1892
    %v1901 = vpack.c.b16 %v1895, %v1894
    %v1902 = vpack.c.b16 %v1897, %v1896
    %v1903 = vpack.c.b16 %v1899, %v1898
    %v1909 = vsel %vm396, %v1797, 0
    %1911 = vmatprep.subr.bf16.mxu0 0
    %1912 = vmatpush1.bf16.msra.mxu0 0
    %1913 = vmatprep.subr.bf16.mxu0 0
    %1914 = vmatpush1.bf16.msra.mxu0 0
    %1915 = vmatprep.subr.bf16.mxu0 0
    %1916 = vmatpush1.bf16.msra.mxu0 0
    %1917 = vmatprep.subr.bf16.mxu0 0
    %1918 = vmatpush1.bf16.msra.mxu0 0
    %1919 = vmatprep.subr.bf16.mxu0 0
    %1920 = vmatpush1.bf16.msra.mxu0 %v1903
    %1921 = vmatprep.subr.bf16.mxu0 0
    %1922 = vmatpush1.bf16.msra.mxu0 %v1902
    %1923 = vmatprep.subr.bf16.mxu0 0
    %1924 = vmatpush1.bf16.msra.mxu0 %v1901
    %1925 = vmatprep.subr.bf16.mxu0 0
    %1926 = vmatpush1.bf16.msra.mxu0 %v1900
    %1927 = vmatprep.subr.bf16.mxu0 0
    %1928 = vmatpush2.bf16.msra.mxu0 0
    %1929 = vmatprep.subr.bf16.mxu0 0
    %1930 = vmatpush2.bf16.msra.mxu0 0
    %1931 = vmatprep.subr.bf16.mxu0 0
    %1932 = vmatpush2.bf16.msra.mxu0 0
    %1933 = vmatprep.subr.bf16.mxu0 0
    %1934 = vmatpush2.bf16.msra.mxu0 0
    %1935 = vmatprep.subr.bf16.mxu0 0
    %1936 = vmatpush2.bf16.msra.mxu0 0
    %1937 = vmatprep.subr.bf16.mxu0 0
    %1938 = vmatpush2.bf16.msra.mxu0 0
    %1939 = vmatprep.subr.bf16.mxu0 0
    %1940 = vmatpush2.bf16.msra.mxu0 0
    %1941 = vmatprep.subr.bf16.mxu0 0
    %1942 = vmatpush2.bf16.msra.mxu0 0
    %1943 = vmatprep.mubr.bf16.mxu0 0
    %1944 = vmatmul.mubr.bf16.gmra.mxu0 %v1909
    %v1945 = vpop.f32.mrf.mxu0
    %v1946 = vadd.f32 %v1879, %v1945
    %v1947 = vpop.f32.mrf.mxu0
    %v1948 = vpop.f32.mrf.mxu0
    %v1949 = vpop.f32.mrf.mxu0
    %1950 = vdwg.mxu0
    %v1951 = vadd.f32 %v1946, %v29
    %v1952 = vmax.f32 %v1951, 0.0
    %v1953 = vpack.c.bf16 %v1952, %v1952
    %v1954 = vld [vmem:[%s2 + $0x60] sm:$0xff]
    %v1955 = vld [vmem:[%s2 + $0x68] sm:$0xff]
    %v1956 = vld [vmem:[%s2 + $0x70] sm:$0xff]
    %v1957 = vld [vmem:[%s2 + $0x78] sm:$0xff]
    %v1958 = vld [vmem:[%s2 + $0x80] sm:$0xff]
    %v1959 = vld [vmem:[%s2 + $0x88] sm:$0xff]
    %v1960 = vld [vmem:[%s2 + $0x90] sm:$0xff]
    %v1961 = vld [vmem:[%s2 + $0x98] sm:$0xff]
    %v1963 = vlaneseq
    %v1964 = vshrl.u32 %v1963, 7
    %v1965 = vsub.s32 0, %v1964
    %v1966 = vrot.slane %v27, %v1965
    %v1967 = vlaneseq
    %v1968 = vshrl.u32 %v1967, 7
    %v1969 = vsub.s32 1, %v1968
    %v1970 = vrot.slane %v27, %v1969
    %v1981 = vunpack.c.l.b16 %v1954
    %v1982 = vunpack.c.h.b16 %v1954
    %v1983 = vunpack.c.l.b16 %v1955
    %v1984 = vunpack.c.h.b16 %v1955
    %v1985 = vunpack.c.l.b16 %v1956
    %v1986 = vunpack.c.h.b16 %v1956
    %v1987 = vunpack.c.l.b16 %v1957
    %v1988 = vunpack.c.h.b16 %v1957
    %v1989 = vunpack.c.l.b16 %v1958
    %v1990 = vunpack.c.h.b16 %v1958
    %v1991 = vunpack.c.l.b16 %v1959
    %v1992 = vunpack.c.h.b16 %v1959
    %v1993 = vunpack.c.l.b16 %v1960
    %v1994 = vunpack.c.h.b16 %v1960
    %v1995 = vunpack.c.l.b16 %v1961
    %v1996 = vunpack.c.h.b16 %v1961
    %v1997 = vpack.c.b16 %v1983, %v1981
    %v1998 = vpack.c.b16 %v1984, %v1982
    %v1999 = vpack.c.b16 %v1987, %v1985
    %v2000 = vpack.c.b16 %v1988, %v1986
    %v2001 = vpack.c.b16 %v1991, %v1989
    %v2002 = vpack.c.b16 %v1992, %v1990
    %v2003 = vpack.c.b16 %v1995, %v1993
    %v2004 = vpack.c.b16 %v1996, %v1994
    %v2014 = vsel %vm396, %v1953, 0
    %2016 = vmatprep.subr.bf16.mxu0 0
    %2017 = vmatpush1.bf16.msra.mxu0 0
    %2018 = vmatprep.subr.bf16.mxu0 0
    %2019 = vmatpush1.bf16.msra.mxu0 0
    %2020 = vmatprep.subr.bf16.mxu0 0
    %2021 = vmatpush1.bf16.msra.mxu0 0
    %2022 = vmatprep.subr.bf16.mxu0 0
    %2023 = vmatpush1.bf16.msra.mxu0 0
    %2024 = vmatprep.subr.bf16.mxu0 %v2004
    %2025 = vmatpush1.bf16.msra.mxu0 %v2003
    %2026 = vmatprep.subr.bf16.mxu0 %v2002
    %2027 = vmatpush1.bf16.msra.mxu0 %v2001
    %2028 = vmatprep.subr.bf16.mxu0 %v2000
    %2029 = vmatpush1.bf16.msra.mxu0 %v1999
    %2030 = vmatprep.subr.bf16.mxu0 %v1998
    %2031 = vmatpush1.bf16.msra.mxu0 %v1997
    %2032 = vmatprep.subr.bf16.mxu0 0
    %2033 = vmatpush2.bf16.msra.mxu0 0
    %2034 = vmatprep.subr.bf16.mxu0 0
    %2035 = vmatpush2.bf16.msra.mxu0 0
    %2036 = vmatprep.subr.bf16.mxu0 0
    %2037 = vmatpush2.bf16.msra.mxu0 0
    %2038 = vmatprep.subr.bf16.mxu0 0
    %2039 = vmatpush2.bf16.msra.mxu0 0
    %2040 = vmatprep.subr.bf16.mxu0 0
    %2041 = vmatpush2.bf16.msra.mxu0 0
    %2042 = vmatprep.subr.bf16.mxu0 0
    %2043 = vmatpush2.bf16.msra.mxu0 0
    %2044 = vmatprep.subr.bf16.mxu0 0
    %2045 = vmatpush2.bf16.msra.mxu0 0
    %2046 = vmatprep.subr.bf16.mxu0 0
    %2047 = vmatpush2.bf16.msra.mxu0 0
    %2048 = vmatprep.mubr.bf16.mxu0 0
    %2049 = vmatmul.mubr.bf16.gmra.mxu0 %v2014
    %v2050 = vpop.f32.mrf.mxu0
    %v2051 = vadd.f32 %v1966, %v2050
    %v2052 = vpop.f32.mrf.mxu0
    %v2053 = vadd.f32 %v1970, %v2052
    %v2054 = vpop.f32.mrf.mxu0
    %v2055 = vpop.f32.mrf.mxu0
    %2056 = vdwg.mxu0
    %v2057 = vmul.f32 %v2051, %v2053
    %v2058 = vpack.c.bf16 %v2057, %v2057
    %v2059 = vld [vmem:[%s4 + $0x8] sm:$0xf]
    %v2060 = vld [vmem:[%s4 + $0xc] sm:$0xf]
    %v2061 = vld [vmem:[%s4 + $0x10] sm:$0xf]
    %v2062 = vld [vmem:[%s4 + $0x14] sm:$0xf]
    %v2063 = vld [vmem:[%s4 + $0x18] sm:$0xf]
    %v2064 = vld [vmem:[%s4 + $0x1c] sm:$0xf]
    %v2065 = vld [vmem:[%s4 + $0x20] sm:$0xf]
    %v2066 = vld [vmem:[%s4 + $0x24] sm:$0xf]
    %v2067 = vld [vmem:[%s4 + $0x28] sm:$0xf]
    %v2068 = vld [vmem:[%s4 + $0x2c] sm:$0xf]
    %v2069 = vld [vmem:[%s4 + $0x30] sm:$0xf]
    %v2070 = vld [vmem:[%s4 + $0x34] sm:$0xf]
    %v2071 = vld [vmem:[%s4 + $0x38] sm:$0xf]
    %v2072 = vld [vmem:[%s4 + $0x3c] sm:$0xf]
    %v2073 = vld [vmem:[%s4 + $0x40] sm:$0xf]
    %v2074 = vld [vmem:[%s4 + $0x44] sm:$0xf]
    %v2091 = vunpack.c.l.b16 %v2059
    %v2092 = vunpack.c.l.b16 %v2060
    %v2093 = vunpack.c.l.b16 %v2061
    %v2094 = vunpack.c.l.b16 %v2062
    %v2095 = vunpack.c.l.b16 %v2063
    %v2096 = vunpack.c.l.b16 %v2064
    %v2097 = vunpack.c.l.b16 %v2065
    %v2098 = vunpack.c.l.b16 %v2066
    %v2099 = vunpack.c.l.b16 %v2067
    %v2100 = vunpack.c.l.b16 %v2068
    %v2101 = vunpack.c.l.b16 %v2069
    %v2102 = vunpack.c.l.b16 %v2070
    %v2103 = vunpack.c.l.b16 %v2071
    %v2104 = vunpack.c.l.b16 %v2072
    %v2105 = vunpack.c.l.b16 %v2073
    %v2106 = vunpack.c.l.b16 %v2074
    %v2107 = vpack.c.b16 %v2092, %v2091
    %v2108 = vpack.c.b16 %v2094, %v2093
    %v2109 = vpack.c.b16 %v2096, %v2095
    %v2110 = vpack.c.b16 %v2098, %v2097
    %v2111 = vpack.c.b16 %v2100, %v2099
    %v2112 = vpack.c.b16 %v2102, %v2101
    %v2113 = vpack.c.b16 %v2104, %v2103
    %v2114 = vpack.c.b16 %v2106, %v2105
    %2123 = vmatprep.subr.bf16.mxu0 0
    %2124 = vmatpush1.bf16.msra.mxu0 %v2114
    %2125 = vmatprep.subr.bf16.mxu0 0
    %2126 = vmatpush1.bf16.msra.mxu0 %v2113
    %2127 = vmatprep.subr.bf16.mxu0 0
    %2128 = vmatpush1.bf16.msra.mxu0 %v2112
    %2129 = vmatprep.subr.bf16.mxu0 0
    %2130 = vmatpush1.bf16.msra.mxu0 %v2111
    %2131 = vmatprep.subr.bf16.mxu0 0
    %2132 = vmatpush1.bf16.msra.mxu0 %v2110
    %2133 = vmatprep.subr.bf16.mxu0 0
    %2134 = vmatpush1.bf16.msra.mxu0 %v2109
    %2135 = vmatprep.subr.bf16.mxu0 0
    %2136 = vmatpush1.bf16.msra.mxu0 %v2108
    %2137 = vmatprep.subr.bf16.mxu0 0
    %2138 = vmatpush1.bf16.msra.mxu0 %v2107
    %2139 = vmatprep.subr.bf16.mxu0 0
    %2140 = vmatpush2.bf16.msra.mxu0 0
    %2141 = vmatprep.subr.bf16.mxu0 0
    %2142 = vmatpush2.bf16.msra.mxu0 0
    %2143 = vmatprep.subr.bf16.mxu0 0
    %2144 = vmatpush2.bf16.msra.mxu0 0
    %2145 = vmatprep.subr.bf16.mxu0 0
    %2146 = vmatpush2.bf16.msra.mxu0 0
    %2147 = vmatprep.subr.bf16.mxu0 0
    %2148 = vmatpush2.bf16.msra.mxu0 0
    %2149 = vmatprep.subr.bf16.mxu0 0
    %2150 = vmatpush2.bf16.msra.mxu0 0
    %2151 = vmatprep.subr.bf16.mxu0 0
    %2152 = vmatpush2.bf16.msra.mxu0 0
    %2153 = vmatprep.subr.bf16.mxu0 0
    %2154 = vmatpush2.bf16.msra.mxu0 0
    %2155 = vmatprep.mubr.bf16.mxu0 0
    %2156 = vmatmul.mubr.bf16.gmra.mxu0 %v2058
    %v2157 = vpop.f32.mrf.mxu0
    %v2158 = vadd.f32 0.0, %v2157
    %v2159 = vpop.f32.mrf.mxu0
    %v2160 = vpop.f32.mrf.mxu0
    %v2161 = vpop.f32.mrf.mxu0
    %2162 = vdwg.mxu0
    %v2163 = vadd.f32 %v2158, %v31
    %vm2164 = vcmask 58368
    %2165 = vst.msk [vmem:[#allocation3] sm:$0x3] %vm2164, %v2163
    // Predicated region
    $region26: #{net_forward.1} parent=1 // pred_check
      _
    $region27: #{net_forward.1} parent=1 // pred_check_branch
      %2167 = sbr.rel (0) target = $region29
    $region28: #{net_forward.1} parent=1 // pred_region
      %s2169 = ssub.s32 32, 32
      %2170 = vsyncadd [#allocation4], %s2169
      %s2172 = sshll.u32 [#allocation3], 4
      %s2173 = int_to_ptr.vmem [resolvable:$true] %s2172
      %2175 = dma.vmem_to_hbm [thread:$0]  %s2173, 32, %s6, [#allocation4]
    $region29: #{net_forward.1} parent=1 // pred_fallthru
      _
    // Predicated region
    $region30: #{net_forward.1} parent=1 // pred_check
      _
    $region31: #{net_forward.1} parent=1 // pred_check_branch
      %2177 = sbr.rel (0) target = $region33
    $region32: #{net_forward.1} parent=1 // pred_region
      %2178 = dma.done [#allocation4], 32
    $region33: #{net_forward.1} parent=1 // pred_fallthru
      _
    %2179 = vsyncpa [#allocation4], 1

</llo_original>
